<compile_context>
chip_gen: v7x
topology: tpu7x:2x2x1
jax: 0.10.0
libtpu: 0.0.40
codegen_flags: <defaults>
</compile_context>

<pallas_src>
import jax
import jax.numpy as jnp
from jax import lax
from jax.experimental import pallas as pl
from jax.experimental.pallas import tpu as pltpu

LRELU_SLOPE = 0.1
KS = 3
DILATIONS = (1, 3, 5)     # convs1 dilations; convs2 all use dilation=1
HALO = 16                 # per-side halo; >= sum(d+1)=12 and sublane aligned
assert HALO >= sum(d + 1 for d in DILATIONS)


def _leaky(x):
    return jnp.where(x > 0, x, LRELU_SLOPE * x)


def _round_up(v, m):
    return (v + m - 1) // m * m


def resblock1(x, w1, b1, w2, b2, *, tile_t=None, compute_dtype=jnp.bfloat16):
    """HiFi-GAN ResBlock1 forward.

    x:  (B, T, C) activations.
    w1: (3, KS, C, C) effective convs1 weights, laid out (stage, tap, Cin, Cout).
    b1: (3, 1, C)     convs1 biases.
    w2, b2: same for convs2 (all dilation 1).
    compute_dtype: MXU operand dtype (bf16 default; f32 for tight-tolerance tests).
    For best MXU/lane utilization keep C a multiple of 128; for C < 128 prefer
    the plain XLA conv path (this kernel becomes lane/overhead bound there).
    """
    B, T, C = x.shape
    assert w1.shape == (3, KS, C, C) and w2.shape == (3, KS, C, C)

    # ---- time tiling (channel-aware; v7x 64 MiB-VMEM safe) -------------------
    if tile_t is None:
        tile_t = 2048 if C <= 256 else 1024
    tile_t = max(HALO, min(_round_up(int(tile_t), HALO), _round_up(T, HALO)))
    if B == 1 and _round_up(T, HALO) >= 2 * HALO and pl.cdiv(T, tile_t) < 2:
        # Keep >= 2 grid steps so v7x's two TensorCores both get work.
        tile_t = _round_up(max((T + 1) // 2, HALO), HALO)
    n_t = pl.cdiv(T, tile_t)
    t_pad = n_t * tile_t
    r_blk = tile_t // HALO                           # halo blocks per tile
    w_ext = tile_t + 2 * HALO                        # extended window length

    x_pad = x if t_pad == T else jnp.pad(x, ((0, 0), (0, t_pad - T), (0, 0)))

    # ---- weight / bias preparation (once, outside the kernel) ---------------
    cdt = compute_dtype
    # (stage, tap, Cin, Cout) -> (stage, tap*Cin, Cout): rows [k*C : (k+1)*C)
    # of the slab are tap k, matching the lane-concatenated activation below.
    w1s = w1.reshape(3, KS * C, C).astype(cdt)
    w2s = w2.reshape(3, KS * C, C).astype(cdt)
    b1f = b1.reshape(3, 1, C).astype(jnp.float32)
    b2f = b2.reshape(3, 1, C).astype(jnp.float32)

    def kernel(xl_ref, xc_ref, xr_ref, w1_ref, b1_ref, w2_ref, b2_ref, o_ref):
        j = pl.program_id(1)

        # Extended (w_ext, C) window = [left halo | tile | right halo], f32.
        xbuf = jnp.concatenate(
            [xl_ref[0], xc_ref[0], xr_ref[0]], axis=0).astype(jnp.float32)

        # Validity mask over *global* time positions: every conv input outside
        # [0, T) must be exactly zero (PyTorch "same" zero padding).  This also
        # neutralizes the clamped halo blocks at sequence edges.  It must be
        # applied before EVERY conv (do not "simplify" it away).
        row = lax.broadcasted_iota(jnp.int32, (w_ext, 1), 0)
        gpos = j * tile_t - HALO + row
        mask = jnp.logical_and(gpos >= 0, gpos < T).astype(jnp.float32)

        bias1 = b1_ref[...]                          # (3, 1, C) f32, read once
        bias2 = b2_ref[...]

        def conv(xt, w_slab, bias, d):
            # Mask out-of-range rows, cast to the MXU operand dtype ONCE, then
            # build the three dilated taps with sublane rolls on the narrow
            # (bf16) array.  Roll wrap-around only pollutes the outer <=12
            # halo rows, which are discarded.  One fused K=3C MXU matmul.
            x0 = (xt * mask).astype(cdt)
            xm = pltpu.roll(x0, d, axis=0)              # in[t-d] -> tap k=0
            xp = pltpu.roll(x0, w_ext - d, axis=0)      # in[t+d] -> tap k=2
            xcat = jnp.concatenate([xm, x0, xp], axis=1)      # (w_ext, 3C)
            acc = jnp.dot(xcat, w_slab, preferred_element_type=jnp.float32)
            return acc + bias

        xcur = xbuf
        for s, d in enumerate(DILATIONS):            # 3 residual stages
            xt = conv(_leaky(xcur), w1_ref[s], bias1[s], d)   # convs1[s], dil d
            xt = conv(_leaky(xt), w2_ref[s], bias2[s], 1)     # convs2[s], dil 1
            xcur = xt + xcur                                  # residual add
        o_ref[0] = xcur[HALO:HALO + tile_t, :].astype(o_ref.dtype)

    vmem_res = pl.BlockSpec(memory_space=pltpu.MemorySpace.VMEM)
    out = pl.pallas_call(
        kernel,
        out_shape=jax.ShapeDtypeStruct((B, t_pad, C), x.dtype),
        grid=(B, n_t),
        in_specs=[
            # left halo, current tile, right halo (edge block indices clamp;
            # the clamped data is masked out inside the kernel).
            pl.BlockSpec((1, HALO, C),
                         lambda b, j: (b, jnp.maximum(j * r_blk - 1, 0), 0)),
            pl.BlockSpec((1, tile_t, C), lambda b, j: (b, j, 0)),
            pl.BlockSpec((1, HALO, C),
                         lambda b, j: (b, jnp.minimum((j + 1) * r_blk,
                                                      n_t * r_blk - 1), 0)),
            vmem_res, vmem_res, vmem_res, vmem_res,  # weights/biases resident
        ],
        out_specs=pl.BlockSpec((1, tile_t, C), lambda b, j: (b, j, 0)),
        compiler_params=pltpu.CompilerParams(
            dimension_semantics=("parallel", "parallel"),
            vmem_limit_bytes=48 * 1024 * 1024),
    )(x_pad, x_pad, x_pad, w1s, b1f, w2s, b2f)
    return out if t_pad == T else out[:, :T, :]


def resblock1_ref(x, w1, b1, w2, b2):
    """Pure-JAX reference (matches PyTorch ResBlock1.forward semantics)."""
    def conv(xt, w, b, d):
        y = lax.conv_general_dilated(
            xt, w, window_strides=(1,), padding=[(d, d)], rhs_dilation=(d,),
            dimension_numbers=("NWC", "WIO", "NWC"),
            precision=lax.Precision.HIGHEST)
        return y + b[None, :, :]
    for s, d in enumerate(DILATIONS):
        xt = _leaky(x)
        xt = conv(xt, w1[s], b1[s], d)
        xt = _leaky(xt)
        xt = conv(xt, w2[s], b2[s], 1)
        x = xt + x
    return x


if __name__ == "__main__":
    B, T, C = 2, 80, 128                             # small test shapes
    key = jax.random.PRNGKey(0)
    ks = jax.random.split(key, 5)
    x = jax.random.normal(ks[0], (B, T, C), jnp.float32)
    # init_weights in HiFi-GAN uses N(0, 0.01); mirror that deterministically.
    w1 = jax.random.normal(ks[1], (3, KS, C, C), jnp.float32) * 0.01
    b1 = jax.random.normal(ks[2], (3, 1, C), jnp.float32) * 0.01
    w2 = jax.random.normal(ks[3], (3, KS, C, C), jnp.float32) * 0.01
    b2 = jax.random.normal(ks[4], (3, 1, C), jnp.float32) * 0.01

    ref = resblock1_ref(x, w1, b1, w2, b2)

    # f32 compute path, 3 time tiles + zero tail -> validates halo/mask/tiling
    # and the fused-tap matmul against the reference at tight tolerance.
    out_f32 = resblock1(x, w1, b1, w2, b2, tile_t=32,
                        compute_dtype=jnp.float32)
    jax.block_until_ready(out_f32)
    assert out_f32.shape == (B, T, C)
    assert jnp.allclose(out_f32, ref, atol=5e-3, rtol=5e-3), "f32 mismatch"

    # Default (bf16 MXU operands, f32 accumulation) path, tiled.
    out_bf16 = resblock1(x, w1, b1, w2, b2, tile_t=32)
    jax.block_until_ready(out_bf16)
    assert out_bf16.shape == (B, T, C)
    assert jnp.allclose(out_bf16, ref, atol=5e-2, rtol=5e-2), "bf16 mismatch"

    # Default tile size (collapses to a single tile here) exercises the
    # clamped-edge halo path on both sequence ends.
    out_def = resblock1(x, w1, b1, w2, b2)
    jax.block_until_ready(out_def)
    assert out_def.shape == (B, T, C)
    assert jnp.allclose(out_def, ref, atol=5e-2, rtol=5e-2), "default mismatch"

    print("KERNEL_OK")
</pallas_src>

<mosaic_0001>
module attributes {stable_mosaic.version = 11 : i64} {
  func.func @kernel(%arg0: i32, %arg1: i32, %arg2: memref<1x16x128xf32, #tpu.memory_space<vmem>>, %arg3: memref<1x32x128xf32, #tpu.memory_space<vmem>>, %arg4: memref<1x16x128xf32, #tpu.memory_space<vmem>>, %arg5: memref<3x384x128xf32, #tpu.memory_space<vmem>>, %arg6: memref<3x1x128xf32, #tpu.memory_space<vmem>>, %arg7: memref<3x384x128xf32, #tpu.memory_space<vmem>>, %arg8: memref<3x1x128xf32, #tpu.memory_space<vmem>>, %arg9: memref<1x32x128xf32, #tpu.memory_space<vmem>>) attributes {dimension_semantics = [#tpu.dimension_semantics<parallel>, #tpu.dimension_semantics<parallel>], iteration_bounds = array<i64: 2, 3>, scalar_prefetch = 0 : i64, scratch_operands = 0 : i64, tpu.core_type = #tpu.core_type<tc>, window_params = [{transform_indices = @transform_0, window_bounds = array<i64: 1, 16, 128>}, {transform_indices = @transform_1, window_bounds = array<i64: 1, 32, 128>}, {transform_indices = @transform_2, window_bounds = array<i64: 1, 16, 128>}, {pipeline_mode = #tpu.pipeline_mode<synchronous>, transform_indices = @transform_3, window_bounds = array<i64: 3, 384, 128>}, {pipeline_mode = #tpu.pipeline_mode<synchronous>, transform_indices = @transform_4, window_bounds = array<i64: 3, 1, 128>}, {pipeline_mode = #tpu.pipeline_mode<synchronous>, transform_indices = @transform_5, window_bounds = array<i64: 3, 384, 128>}, {pipeline_mode = #tpu.pipeline_mode<synchronous>, transform_indices = @transform_6, window_bounds = array<i64: 3, 1, 128>}, {transform_indices = @transform_7, window_bounds = array<i64: 1, 32, 128>}]} {
    %c0 = arith.constant 0 : index
    %c0_0 = arith.constant 0 : index
    %c0_1 = arith.constant 0 : index
    %0 = vector.load %arg2[%c0, %c0_0, %c0_1] : memref<1x16x128xf32, #tpu.memory_space<vmem>>, vector<1x16x128xf32>
    %1 = vector.shape_cast %0 : vector<1x16x128xf32> to vector<16x128xf32>
    %c0_2 = arith.constant 0 : index
    %c0_3 = arith.constant 0 : index
    %c0_4 = arith.constant 0 : index
    %2 = vector.load %arg3[%c0_2, %c0_3, %c0_4] : memref<1x32x128xf32, #tpu.memory_space<vmem>>, vector<1x32x128xf32>
    %3 = vector.shape_cast %2 : vector<1x32x128xf32> to vector<32x128xf32>
    %c0_5 = arith.constant 0 : index
    %c0_6 = arith.constant 0 : index
    %c0_7 = arith.constant 0 : index
    %4 = vector.load %arg4[%c0_5, %c0_6, %c0_7] : memref<1x16x128xf32, #tpu.memory_space<vmem>>, vector<1x16x128xf32>
    %5 = vector.shape_cast %4 : vector<1x16x128xf32> to vector<16x128xf32>
    %6 = tpu.concatenate %1, %3, %5 in 0 : vector<16x128xf32>, vector<32x128xf32>, vector<16x128xf32> -> vector<64x128xf32>
    %7 = tpu.iota {dimensions = array<i32: 0>} : vector<64x1xi32>
    %c32_i32 = arith.constant 32 : i32
    %8 = arith.muli %arg1, %c32_i32 : i32
    %c16_i32 = arith.constant 16 : i32
    %9 = arith.subi %8, %c16_i32 : i32
    %10 = vector.broadcast %9 : i32 to vector<64x1xi32>
    %11 = arith.addi %10, %7 : vector<64x1xi32>
    %c0_i32 = arith.constant 0 : i32
    %12 = vector.broadcast %c0_i32 : i32 to vector<64x1xi32>
    %13 = arith.cmpi sge, %11, %12 : vector<64x1xi32>
    %c80_i32 = arith.constant 80 : i32
    %14 = vector.broadcast %c80_i32 : i32 to vector<64x1xi32>
    %15 = arith.cmpi slt, %11, %14 : vector<64x1xi32>
    %16 = arith.andi %13, %15 : vector<64x1xi1>
    %17 = arith.extui %16 : vector<64x1xi1> to vector<64x1xi32>
    %18 = arith.sitofp %17 : vector<64x1xi32> to vector<64x1xf32>
    %c0_8 = arith.constant 0 : index
    %c0_9 = arith.constant 0 : index
    %c0_10 = arith.constant 0 : index
    %19 = vector.load %arg6[%c0_8, %c0_9, %c0_10] : memref<3x1x128xf32, #tpu.memory_space<vmem>>, vector<3x1x128xf32>
    %c0_11 = arith.constant 0 : index
    %c0_12 = arith.constant 0 : index
    %c0_13 = arith.constant 0 : index
    %20 = vector.load %arg8[%c0_11, %c0_12, %c0_13] : memref<3x1x128xf32, #tpu.memory_space<vmem>>, vector<3x1x128xf32>
    %cst = arith.constant 0.000000e+00 : f32
    %21 = vector.broadcast %cst : f32 to vector<64x128xf32>
    %22 = arith.cmpf ogt, %6, %21 : vector<64x128xf32>
    %cst_14 = arith.constant 1.000000e-01 : f32
    %23 = vector.broadcast %cst_14 : f32 to vector<64x128xf32>
    %24 = arith.mulf %23, %6 : vector<64x128xf32>
    %25 = arith.select %22, %6, %24 : vector<64x128xi1>, vector<64x128xf32>
    %c0_15 = arith.constant 0 : index
    %c0_16 = arith.constant 0 : index
    %c0_17 = arith.constant 0 : index
    %26 = vector.load %arg5[%c0_15, %c0_16, %c0_17] : memref<3x384x128xf32, #tpu.memory_space<vmem>>, vector<1x384x128xf32>
    %27 = vector.shape_cast %26 : vector<1x384x128xf32> to vector<384x128xf32>
    %28 = vector.extract_strided_slice %19 {offsets = [0, 0, 0], sizes = [1, 1, 128], strides = [1, 1, 1]} : vector<3x1x128xf32> to vector<1x1x128xf32>
    %29 = vector.shape_cast %28 : vector<1x1x128xf32> to vector<1x128xf32>
    %30 = vector.broadcast %18 : vector<64x1xf32> to vector<64x128xf32>
    %31 = arith.mulf %25, %30 : vector<64x128xf32>
    %c1_i32 = arith.constant 1 : i32
    %32 = tpu.dynamic_rotate %31 by %c1_i32 dim 0 : vector<64x128xf32>, i32 -> vector<64x128xf32>
    %c63_i32 = arith.constant 63 : i32
    %33 = tpu.dynamic_rotate %31 by %c63_i32 dim 0 : vector<64x128xf32>, i32 -> vector<64x128xf32>
    %34 = tpu.concatenate %32, %31, %33 in 1 : vector<64x128xf32>, vector<64x128xf32>, vector<64x128xf32> -> vector<64x384xf32>
    %cst_18 = arith.constant dense<0.000000e+00> : vector<64x128xf32>
    %35 = tpu.matmul %34, %27, %cst_18 {dimension_numbers = #tpu.dot_dimension_numbers<[1], [0], [0], [1], [0, 0, 1, 1], [], []>} : vector<64x384xf32>, vector<384x128xf32>, vector<64x128xf32> -> vector<64x128xf32>
    %36 = vector.broadcast %29 : vector<1x128xf32> to vector<64x128xf32>
    %37 = arith.addf %35, %36 : vector<64x128xf32>
    %cst_19 = arith.constant 0.000000e+00 : f32
    %38 = vector.broadcast %cst_19 : f32 to vector<64x128xf32>
    %39 = arith.cmpf ogt, %37, %38 : vector<64x128xf32>
    %cst_20 = arith.constant 1.000000e-01 : f32
    %40 = vector.broadcast %cst_20 : f32 to vector<64x128xf32>
    %41 = arith.mulf %40, %37 : vector<64x128xf32>
    %42 = arith.select %39, %37, %41 : vector<64x128xi1>, vector<64x128xf32>
    %c0_21 = arith.constant 0 : index
    %c0_22 = arith.constant 0 : index
    %c0_23 = arith.constant 0 : index
    %43 = vector.load %arg7[%c0_21, %c0_22, %c0_23] : memref<3x384x128xf32, #tpu.memory_space<vmem>>, vector<1x384x128xf32>
    %44 = vector.shape_cast %43 : vector<1x384x128xf32> to vector<384x128xf32>
    %45 = vector.extract_strided_slice %20 {offsets = [0, 0, 0], sizes = [1, 1, 128], strides = [1, 1, 1]} : vector<3x1x128xf32> to vector<1x1x128xf32>
    %46 = vector.shape_cast %45 : vector<1x1x128xf32> to vector<1x128xf32>
    %47 = vector.broadcast %18 : vector<64x1xf32> to vector<64x128xf32>
    %48 = arith.mulf %42, %47 : vector<64x128xf32>
    %c1_i32_24 = arith.constant 1 : i32
    %49 = tpu.dynamic_rotate %48 by %c1_i32_24 dim 0 : vector<64x128xf32>, i32 -> vector<64x128xf32>
    %c63_i32_25 = arith.constant 63 : i32
    %50 = tpu.dynamic_rotate %48 by %c63_i32_25 dim 0 : vector<64x128xf32>, i32 -> vector<64x128xf32>
    %51 = tpu.concatenate %49, %48, %50 in 1 : vector<64x128xf32>, vector<64x128xf32>, vector<64x128xf32> -> vector<64x384xf32>
    %cst_26 = arith.constant dense<0.000000e+00> : vector<64x128xf32>
    %52 = tpu.matmul %51, %44, %cst_26 {dimension_numbers = #tpu.dot_dimension_numbers<[1], [0], [0], [1], [0, 0, 1, 1], [], []>} : vector<64x384xf32>, vector<384x128xf32>, vector<64x128xf32> -> vector<64x128xf32>
    %53 = vector.broadcast %46 : vector<1x128xf32> to vector<64x128xf32>
    %54 = arith.addf %52, %53 : vector<64x128xf32>
    %55 = arith.addf %54, %6 : vector<64x128xf32>
    %cst_27 = arith.constant 0.000000e+00 : f32
    %56 = vector.broadcast %cst_27 : f32 to vector<64x128xf32>
    %57 = arith.cmpf ogt, %55, %56 : vector<64x128xf32>
    %cst_28 = arith.constant 1.000000e-01 : f32
    %58 = vector.broadcast %cst_28 : f32 to vector<64x128xf32>
    %59 = arith.mulf %58, %55 : vector<64x128xf32>
    %60 = arith.select %57, %55, %59 : vector<64x128xi1>, vector<64x128xf32>
    %c1 = arith.constant 1 : index
    %c0_29 = arith.constant 0 : index
    %c0_30 = arith.constant 0 : index
    %61 = vector.load %arg5[%c1, %c0_29, %c0_30] : memref<3x384x128xf32, #tpu.memory_space<vmem>>, vector<1x384x128xf32>
    %62 = vector.shape_cast %61 : vector<1x384x128xf32> to vector<384x128xf32>
    %63 = vector.extract_strided_slice %19 {offsets = [1, 0, 0], sizes = [1, 1, 128], strides = [1, 1, 1]} : vector<3x1x128xf32> to vector<1x1x128xf32>
    %64 = vector.shape_cast %63 : vector<1x1x128xf32> to vector<1x128xf32>
    %65 = vector.broadcast %18 : vector<64x1xf32> to vector<64x128xf32>
    %66 = arith.mulf %60, %65 : vector<64x128xf32>
    %c3_i32 = arith.constant 3 : i32
    %67 = tpu.dynamic_rotate %66 by %c3_i32 dim 0 : vector<64x128xf32>, i32 -> vector<64x128xf32>
    %c61_i32 = arith.constant 61 : i32
    %68 = tpu.dynamic_rotate %66 by %c61_i32 dim 0 : vector<64x128xf32>, i32 -> vector<64x128xf32>
    %69 = tpu.concatenate %67, %66, %68 in 1 : vector<64x128xf32>, vector<64x128xf32>, vector<64x128xf32> -> vector<64x384xf32>
    %cst_31 = arith.constant dense<0.000000e+00> : vector<64x128xf32>
    %70 = tpu.matmul %69, %62, %cst_31 {dimension_numbers = #tpu.dot_dimension_numbers<[1], [0], [0], [1], [0, 0, 1, 1], [], []>} : vector<64x384xf32>, vector<384x128xf32>, vector<64x128xf32> -> vector<64x128xf32>
    %71 = vector.broadcast %64 : vector<1x128xf32> to vector<64x128xf32>
    %72 = arith.addf %70, %71 : vector<64x128xf32>
    %cst_32 = arith.constant 0.000000e+00 : f32
    %73 = vector.broadcast %cst_32 : f32 to vector<64x128xf32>
    %74 = arith.cmpf ogt, %72, %73 : vector<64x128xf32>
    %cst_33 = arith.constant 1.000000e-01 : f32
    %75 = vector.broadcast %cst_33 : f32 to vector<64x128xf32>
    %76 = arith.mulf %75, %72 : vector<64x128xf32>
    %77 = arith.select %74, %72, %76 : vector<64x128xi1>, vector<64x128xf32>
    %c1_34 = arith.constant 1 : index
    %c0_35 = arith.constant 0 : index
    %c0_36 = arith.constant 0 : index
    %78 = vector.load %arg7[%c1_34, %c0_35, %c0_36] : memref<3x384x128xf32, #tpu.memory_space<vmem>>, vector<1x384x128xf32>
    %79 = vector.shape_cast %78 : vector<1x384x128xf32> to vector<384x128xf32>
    %80 = vector.extract_strided_slice %20 {offsets = [1, 0, 0], sizes = [1, 1, 128], strides = [1, 1, 1]} : vector<3x1x128xf32> to vector<1x1x128xf32>
    %81 = vector.shape_cast %80 : vector<1x1x128xf32> to vector<1x128xf32>
    %82 = vector.broadcast %18 : vector<64x1xf32> to vector<64x128xf32>
    %83 = arith.mulf %77, %82 : vector<64x128xf32>
    %c1_i32_37 = arith.constant 1 : i32
    %84 = tpu.dynamic_rotate %83 by %c1_i32_37 dim 0 : vector<64x128xf32>, i32 -> vector<64x128xf32>
    %c63_i32_38 = arith.constant 63 : i32
    %85 = tpu.dynamic_rotate %83 by %c63_i32_38 dim 0 : vector<64x128xf32>, i32 -> vector<64x128xf32>
    %86 = tpu.concatenate %84, %83, %85 in 1 : vector<64x128xf32>, vector<64x128xf32>, vector<64x128xf32> -> vector<64x384xf32>
    %cst_39 = arith.constant dense<0.000000e+00> : vector<64x128xf32>
    %87 = tpu.matmul %86, %79, %cst_39 {dimension_numbers = #tpu.dot_dimension_numbers<[1], [0], [0], [1], [0, 0, 1, 1], [], []>} : vector<64x384xf32>, vector<384x128xf32>, vector<64x128xf32> -> vector<64x128xf32>
    %88 = vector.broadcast %81 : vector<1x128xf32> to vector<64x128xf32>
    %89 = arith.addf %87, %88 : vector<64x128xf32>
    %90 = arith.addf %89, %55 : vector<64x128xf32>
    %cst_40 = arith.constant 0.000000e+00 : f32
    %91 = vector.broadcast %cst_40 : f32 to vector<64x128xf32>
    %92 = arith.cmpf ogt, %90, %91 : vector<64x128xf32>
    %cst_41 = arith.constant 1.000000e-01 : f32
    %93 = vector.broadcast %cst_41 : f32 to vector<64x128xf32>
    %94 = arith.mulf %93, %90 : vector<64x128xf32>
    %95 = arith.select %92, %90, %94 : vector<64x128xi1>, vector<64x128xf32>
    %c2 = arith.constant 2 : index
    %c0_42 = arith.constant 0 : index
    %c0_43 = arith.constant 0 : index
    %96 = vector.load %arg5[%c2, %c0_42, %c0_43] : memref<3x384x128xf32, #tpu.memory_space<vmem>>, vector<1x384x128xf32>
    %97 = vector.shape_cast %96 : vector<1x384x128xf32> to vector<384x128xf32>
    %98 = vector.extract_strided_slice %19 {offsets = [2, 0, 0], sizes = [1, 1, 128], strides = [1, 1, 1]} : vector<3x1x128xf32> to vector<1x1x128xf32>
    %99 = vector.shape_cast %98 : vector<1x1x128xf32> to vector<1x128xf32>
    %100 = vector.broadcast %18 : vector<64x1xf32> to vector<64x128xf32>
    %101 = arith.mulf %95, %100 : vector<64x128xf32>
    %c5_i32 = arith.constant 5 : i32
    %102 = tpu.dynamic_rotate %101 by %c5_i32 dim 0 : vector<64x128xf32>, i32 -> vector<64x128xf32>
    %c59_i32 = arith.constant 59 : i32
    %103 = tpu.dynamic_rotate %101 by %c59_i32 dim 0 : vector<64x128xf32>, i32 -> vector<64x128xf32>
    %104 = tpu.concatenate %102, %101, %103 in 1 : vector<64x128xf32>, vector<64x128xf32>, vector<64x128xf32> -> vector<64x384xf32>
    %cst_44 = arith.constant dense<0.000000e+00> : vector<64x128xf32>
    %105 = tpu.matmul %104, %97, %cst_44 {dimension_numbers = #tpu.dot_dimension_numbers<[1], [0], [0], [1], [0, 0, 1, 1], [], []>} : vector<64x384xf32>, vector<384x128xf32>, vector<64x128xf32> -> vector<64x128xf32>
    %106 = vector.broadcast %99 : vector<1x128xf32> to vector<64x128xf32>
    %107 = arith.addf %105, %106 : vector<64x128xf32>
    %cst_45 = arith.constant 0.000000e+00 : f32
    %108 = vector.broadcast %cst_45 : f32 to vector<64x128xf32>
    %109 = arith.cmpf ogt, %107, %108 : vector<64x128xf32>
    %cst_46 = arith.constant 1.000000e-01 : f32
    %110 = vector.broadcast %cst_46 : f32 to vector<64x128xf32>
    %111 = arith.mulf %110, %107 : vector<64x128xf32>
    %112 = arith.select %109, %107, %111 : vector<64x128xi1>, vector<64x128xf32>
    %c2_47 = arith.constant 2 : index
    %c0_48 = arith.constant 0 : index
    %c0_49 = arith.constant 0 : index
    %113 = vector.load %arg7[%c2_47, %c0_48, %c0_49] : memref<3x384x128xf32, #tpu.memory_space<vmem>>, vector<1x384x128xf32>
    %114 = vector.shape_cast %113 : vector<1x384x128xf32> to vector<384x128xf32>
    %115 = vector.extract_strided_slice %20 {offsets = [2, 0, 0], sizes = [1, 1, 128], strides = [1, 1, 1]} : vector<3x1x128xf32> to vector<1x1x128xf32>
    %116 = vector.shape_cast %115 : vector<1x1x128xf32> to vector<1x128xf32>
    %117 = vector.broadcast %18 : vector<64x1xf32> to vector<64x128xf32>
    %118 = arith.mulf %112, %117 : vector<64x128xf32>
    %c1_i32_50 = arith.constant 1 : i32
    %119 = tpu.dynamic_rotate %118 by %c1_i32_50 dim 0 : vector<64x128xf32>, i32 -> vector<64x128xf32>
    %c63_i32_51 = arith.constant 63 : i32
    %120 = tpu.dynamic_rotate %118 by %c63_i32_51 dim 0 : vector<64x128xf32>, i32 -> vector<64x128xf32>
    %121 = tpu.concatenate %119, %118, %120 in 1 : vector<64x128xf32>, vector<64x128xf32>, vector<64x128xf32> -> vector<64x384xf32>
    %cst_52 = arith.constant dense<0.000000e+00> : vector<64x128xf32>
    %122 = tpu.matmul %121, %114, %cst_52 {dimension_numbers = #tpu.dot_dimension_numbers<[1], [0], [0], [1], [0, 0, 1, 1], [], []>} : vector<64x384xf32>, vector<384x128xf32>, vector<64x128xf32> -> vector<64x128xf32>
    %123 = vector.broadcast %116 : vector<1x128xf32> to vector<64x128xf32>
    %124 = arith.addf %122, %123 : vector<64x128xf32>
    %125 = arith.addf %124, %90 : vector<64x128xf32>
    %126 = vector.extract_strided_slice %125 {offsets = [16, 0], sizes = [32, 128], strides = [1, 1]} : vector<64x128xf32> to vector<32x128xf32>
    %c0_53 = arith.constant 0 : index
    %c0_54 = arith.constant 0 : index
    %c0_55 = arith.constant 0 : index
    %127 = vector.load %arg9[%c0_53, %c0_54, %c0_55] : memref<1x32x128xf32, #tpu.memory_space<vmem>>, vector<1x32x128xf32>
    %128 = vector.shape_cast %127 : vector<1x32x128xf32> to vector<32x128xf32>
    %129 = vector.shape_cast %126 : vector<32x128xf32> to vector<1x32x128xf32>
    tpu.vector_store %arg9[%c0_53, %c0_54, %c0_55], %129 {strides = array<i32>} : memref<1x32x128xf32, #tpu.memory_space<vmem>>, vector<1x32x128xf32>,
    return
  }
  func.func @transform_0(%arg0: i32, %arg1: i32) -> (i32, i32, i32) {
    %c2_i32 = arith.constant 2 : i32
    %0 = arith.muli %arg1, %c2_i32 : i32
    %c1_i32 = arith.constant 1 : i32
    %1 = arith.subi %0, %c1_i32 : i32
    %c0_i32 = arith.constant 0 : i32
    %2 = arith.maxsi %1, %c0_i32 : i32
    %c0_i32_0 = arith.constant 0 : i32
    %c0_i32_1 = arith.constant 0 : i32
    return %arg0, %2, %c0_i32_0 : i32, i32, i32
  }
  func.func @transform_1(%arg0: i32, %arg1: i32) -> (i32, i32, i32) {
    %c0_i32 = arith.constant 0 : i32
    %c0_i32_0 = arith.constant 0 : i32
    return %arg0, %arg1, %c0_i32 : i32, i32, i32
  }
  func.func @transform_2(%arg0: i32, %arg1: i32) -> (i32, i32, i32) {
    %c1_i32 = arith.constant 1 : i32
    %0 = arith.addi %arg1, %c1_i32 : i32
    %c2_i32 = arith.constant 2 : i32
    %1 = arith.muli %0, %c2_i32 : i32
    %c5_i32 = arith.constant 5 : i32
    %2 = arith.minsi %1, %c5_i32 : i32
    %c0_i32 = arith.constant 0 : i32
    %c0_i32_0 = arith.constant 0 : i32
    return %arg0, %2, %c0_i32 : i32, i32, i32
  }
  func.func @transform_3(%arg0: i32, %arg1: i32) -> (i32, i32, i32) {
    %c0_i32 = arith.constant 0 : i32
    %c0_i32_0 = arith.constant 0 : i32
    %c0_i32_1 = arith.constant 0 : i32
    %c0_i32_2 = arith.constant 0 : i32
    return %c0_i32, %c0_i32_0, %c0_i32_1 : i32, i32, i32
  }
  func.func @transform_4(%arg0: i32, %arg1: i32) -> (i32, i32, i32) {
    %c0_i32 = arith.constant 0 : i32
    %c0_i32_0 = arith.constant 0 : i32
    %c0_i32_1 = arith.constant 0 : i32
    %c0_i32_2 = arith.constant 0 : i32
    return %c0_i32, %c0_i32_0, %c0_i32_1 : i32, i32, i32
  }
  func.func @transform_5(%arg0: i32, %arg1: i32) -> (i32, i32, i32) {
    %c0_i32 = arith.constant 0 : i32
    %c0_i32_0 = arith.constant 0 : i32
    %c0_i32_1 = arith.constant 0 : i32
    %c0_i32_2 = arith.constant 0 : i32
    return %c0_i32, %c0_i32_0, %c0_i32_1 : i32, i32, i32
  }
  func.func @transform_6(%arg0: i32, %arg1: i32) -> (i32, i32, i32) {
    %c0_i32 = arith.constant 0 : i32
    %c0_i32_0 = arith.constant 0 : i32
    %c0_i32_1 = arith.constant 0 : i32
    %c0_i32_2 = arith.constant 0 : i32
    return %c0_i32, %c0_i32_0, %c0_i32_1 : i32, i32, i32
  }
  func.func @transform_7(%arg0: i32, %arg1: i32) -> (i32, i32, i32) {
    %c0_i32 = arith.constant 0 : i32
    %c0_i32_0 = arith.constant 0 : i32
    return %arg0, %arg1, %c0_i32 : i32, i32, i32
  }
}

</mosaic_0001>

<llo_original>
// kernel: tpu_custom_call.1
$region0: #{tpu_custom_call.1}
  #allocation0 [shape = 'u32[]', space=smem, size = 0x4, offset = 0x4, fixed_abs, tag = 'smem constant byte address 0x4 - core index']
  #allocation1 [shape = 'u32[144,128]{1,0:T(1,128)}', space=vmem, size = 0x12000, scoped, tag = 'internal scratch']
  %s0 = inlined_call_operand.hbm [shape: f32[2,96,128], index: 0, kind: input, shape index: {}]
  %s1 = inlined_call_operand.hbm [shape: f32[2,96,128], index: 1, kind: input, shape index: {}]
  %s2 = inlined_call_operand.hbm [shape: f32[2,96,128], index: 2, kind: input, shape index: {}]
  %s3 = inlined_call_operand.hbm [shape: f32[3,384,128], index: 3, kind: input, shape index: {}]
  %s4 = inlined_call_operand.vmem [shape: f32[3,1,128], index: 4, kind: input, shape index: {}]
  %s5 = inlined_call_operand.hbm [shape: f32[3,384,128], index: 5, kind: input, shape index: {}]
  %s6 = inlined_call_operand.vmem [shape: f32[3,1,128], index: 6, kind: input, shape index: {}]
  %s7 = inlined_call_operand.hbm [shape: f32[2,96,128], index: 7, kind: output, shape index: {}]
  %s8 = sld [smem:[#allocation0]]
  $region81: #{tpu_custom_call.1} parent=0
    _
  %s10 = ssub.s32 1, %s8
  %s11 = scalar_select 0, %s10, %s8
  $region1: #{tpu_custom_call.1} parent=0
    #allocation2 [shape = 'u8[16384]{0}', space=vmem, size = 0x4000, scoped, tag = 'input window, operand 0']
    #allocation3 [shape = 's32[2]{0}', space=sflag, size = 0x8, scoped, tag = 'scoped memory for tpu_custom_call.1']
    #allocation4 [shape = 's32[2]{0}', space=sflag, size = 0x8, scoped, tag = 'scoped memory for tpu_custom_call.1']
    #allocation5 [shape = 'u8[32768]{0}', space=vmem, size = 0x8000, scoped, tag = 'input window, operand 1']
    #allocation6 [shape = 's32[2]{0}', space=sflag, size = 0x8, scoped, tag = 'scoped memory for tpu_custom_call.1']
    #allocation7 [shape = 'u8[16384]{0}', space=vmem, size = 0x4000, scoped, tag = 'input window, operand 2']
    #allocation8 [shape = 'u8[589824]{0}', space=vmem, size = 0x90000, scoped, tag = 'input window, operand 3, single buffered']
    #allocation9 [shape = 's32[1]{0}', space=sflag, size = 0x4, scoped, tag = 'scoped memory for tpu_custom_call.1']
    #allocation10 [shape = 'u8[589824]{0}', space=vmem, size = 0x90000, scoped, tag = 'input window, operand 5, single buffered']
    #allocation11 [shape = 'u8[32768]{0}', space=vmem, size = 0x8000, scoped, tag = 'output window, operand 0']
    %12 = vsyncpa [#allocation3], 0
    %s13 = scalar_lea.sflag [#allocation3], 1
    %14 = vsyncpa %s13, 0
    %15 = vsyncpa [#allocation6], 0
    %s16 = scalar_lea.sflag [#allocation6], 1
    %17 = vsyncpa %s16, 0
    %18 = vsyncpa [#allocation9], 0
    %19 = vsyncpa [#allocation4], 0
    %s20 = scalar_lea.sflag [#allocation4], 1
    %21 = vsyncpa %s20, 0
    loop: start=0, step=1, limit=8
    $region2: #{tpu_custom_call.1} parent=1 // loop_pre_header
      _
    $region3: #{tpu_custom_call.1} parent=1 // loop_header
      %s23 = sphi 0, %s27
      %p24 = scmp.ge.s32.totalorder %s23, 8
      %s30 = sphi 0, %s42
      %s31 = sphi 0, %s38
      %s32 = sphi 0, %s30
      %s33 = sphi 0, %s31
      %s34 = sphi 0, %s32
      %s35 = sphi 0, %s33
      %s55 = sphi 0, %s57
      %s58 = sphi 0, %s55
      %s59 = sphi 0, %s58
      %s75 = sphi 0, %s59
      %s83 = sphi 0, %s85
      %s86 = sphi 0, %s83
      %s87 = sphi 0, %s86
      %s103 = sphi 0, %s87
      %s119 = sphi 0, %s121
      %s122 = sphi 0, %s119
      %s123 = sphi 0, %s122
      %s139 = sphi 0, %s123
      %s143 = sphi 0, %s143
      %s145 = sphi 0, %s143
      %s146 = sphi 0, %s145
      %s160 = sphi 0, %s146
      %s164 = sphi 0, %s164
      %s166 = sphi 0, %s164
      %s167 = sphi 0, %s166
      %s181 = sphi 0, %s167
      %s185 = sphi 0, %s185
      %s187 = sphi 0, %s185
      %s188 = sphi 0, %s187
      %s202 = sphi 0, %s188
      %s206 = sphi 0, %s206
      %s208 = sphi 0, %s206
      %s209 = sphi 0, %s208
      %s223 = sphi 0, %s209
      %s231 = sphi 0, %s233
      %s234 = sphi 0, %s231
      %s235 = sphi 0, %s234
      %s251 = sphi 0, %s235
    $region4: #{tpu_custom_call.1} parent=1 // loop_header_branch
      %26 = sbr.rel (%p24) target = $region8
    $region5: #{tpu_custom_call.1} parent=1 // loop_body
      %s28 = ssub.s32 %s23, 1
      %s29 = ssub.s32 %s23, 2
      %s36 = sadd.s32 1, %s31
      %p37 = scmp.ge.s32.totalorder %s36, 3
      %s38 = scalar_select %p37, 0, %s36
      %s39 = sadd.s32 1, %s30
      %s40 = scalar_select %p37, %s39, %s30
      %p41 = scmp.ge.s32.totalorder %s40, 2
      %s42 = scalar_select %p41, 0, %s40
      %s43 = smul.u32 %s31, 2
      %s44 = ssub.s32 %s43, 1
      %p45 = scmp.gt.s32.totalorder %s44, 0
      %s46 = scalar_select %p45, %s44, 0
      %s47 = smul.u32 %s38, 2
      %s48 = ssub.s32 %s47, 1
      %p49 = scmp.gt.s32.totalorder %s48, 0
      %s50 = scalar_select %p49, %s48, 0
      %s51 = ssub.s32 %s30, %s42
      %s52 = ssub.s32 %s46, %s50
      %s53 = sor.u32 %s51, %s52
      %p54 = scmp.eq.s32.totalorder %s53, 0
      %s56 = sadd.s32 %s55, 1
      %s57 = scalar_select %p54, %s55, %s56
      %p60 = pneg %p54
      %p61 = scmp.eq.s32.totalorder %s23, 5
      %p62 = por %p60, %p61
      %p63 = scmp.ne.s32.totalorder %s55, %s58
      %p64 = scmp.eq.s32.totalorder %s23, 0
      %p65 = por %p63, %p64
      %p66 = scmp.ne.s32.totalorder %s55, %s58
      %p67 = scmp.eq.s32.totalorder %s28, 5
      %p68 = por %p66, %p67
      %p69 = scmp.ne.s32.totalorder %s58, %s59
      %p70 = scmp.eq.s32.totalorder %s28, 0
      %p71 = por %p69, %p70
      %p72 = scmp.ne.s32.totalorder %s58, %s59
      %p73 = scmp.eq.s32.totalorder %s29, 5
      %p74 = por %p72, %p73
      %p76 = scmp.ne.s32.totalorder %s59, %s75
      %p77 = scmp.eq.s32.totalorder %s29, 0
      %p78 = por %p76, %p77
      %s79 = ssub.s32 %s30, %s42
      %s80 = ssub.s32 %s31, %s38
      %s81 = sor.u32 %s79, %s80
      %p82 = scmp.eq.s32.totalorder %s81, 0
      %s84 = sadd.s32 %s83, 1
      %s85 = scalar_select %p82, %s83, %s84
      %p88 = pneg %p82
      %p89 = scmp.eq.s32.totalorder %s23, 5
      %p90 = por %p88, %p89
      %p91 = scmp.ne.s32.totalorder %s83, %s86
      %p92 = scmp.eq.s32.totalorder %s23, 0
      %p93 = por %p91, %p92
      %p94 = scmp.ne.s32.totalorder %s83, %s86
      %p95 = scmp.eq.s32.totalorder %s28, 5
      %p96 = por %p94, %p95
      %p97 = scmp.ne.s32.totalorder %s86, %s87
      %p98 = scmp.eq.s32.totalorder %s28, 0
      %p99 = por %p97, %p98
      %p100 = scmp.ne.s32.totalorder %s86, %s87
      %p101 = scmp.eq.s32.totalorder %s29, 5
      %p102 = por %p100, %p101
      %p104 = scmp.ne.s32.totalorder %s87, %s103
      %p105 = scmp.eq.s32.totalorder %s29, 0
      %p106 = por %p104, %p105
      %s107 = sadd.s32 %s31, 1
      %s108 = smul.u32 %s107, 2
      %p109 = scmp.lt.s32.totalorder %s108, 5
      %s110 = scalar_select %p109, %s108, 5
      %s111 = sadd.s32 %s38, 1
      %s112 = smul.u32 %s111, 2
      %p113 = scmp.lt.s32.totalorder %s112, 5
      %s114 = scalar_select %p113, %s112, 5
      %s115 = ssub.s32 %s30, %s42
      %s116 = ssub.s32 %s110, %s114
      %s117 = sor.u32 %s115, %s116
      %p118 = scmp.eq.s32.totalorder %s117, 0
      %s120 = sadd.s32 %s119, 1
      %s121 = scalar_select %p118, %s119, %s120
      %p124 = pneg %p118
      %p125 = scmp.eq.s32.totalorder %s23, 5
      %p126 = por %p124, %p125
      %p127 = scmp.ne.s32.totalorder %s119, %s122
      %p128 = scmp.eq.s32.totalorder %s23, 0
      %p129 = por %p127, %p128
      %p130 = scmp.ne.s32.totalorder %s119, %s122
      %p131 = scmp.eq.s32.totalorder %s28, 5
      %p132 = por %p130, %p131
      %p133 = scmp.ne.s32.totalorder %s122, %s123
      %p134 = scmp.eq.s32.totalorder %s28, 0
      %p135 = por %p133, %p134
      %p136 = scmp.ne.s32.totalorder %s122, %s123
      %p137 = scmp.eq.s32.totalorder %s29, 5
      %p138 = por %p136, %p137
      %p140 = scmp.ne.s32.totalorder %s123, %s139
      %p141 = scmp.eq.s32.totalorder %s29, 0
      %p142 = por %p140, %p141
      %s144 = sadd.s32 %s143, 1
      %p147 = scmp.eq.s32.totalorder %s23, 5
      %p148 = scmp.ne.s32.totalorder %s143, %s145
      %p149 = scmp.eq.s32.totalorder %s23, 0
      %p150 = por %p148, %p149
      %p151 = scmp.ne.s32.totalorder %s143, %s145
      %p152 = scmp.eq.s32.totalorder %s28, 5
      %p153 = por %p151, %p152
      %p154 = scmp.ne.s32.totalorder %s145, %s146
      %p155 = scmp.eq.s32.totalorder %s28, 0
      %p156 = por %p154, %p155
      %p157 = scmp.ne.s32.totalorder %s145, %s146
      %p158 = scmp.eq.s32.totalorder %s29, 5
      %p159 = por %p157, %p158
      %p161 = scmp.ne.s32.totalorder %s146, %s160
      %p162 = scmp.eq.s32.totalorder %s29, 0
      %p163 = por %p161, %p162
      %s165 = sadd.s32 %s164, 1
      %p168 = scmp.eq.s32.totalorder %s23, 5
      %p169 = scmp.ne.s32.totalorder %s164, %s166
      %p170 = scmp.eq.s32.totalorder %s23, 0
      %p171 = por %p169, %p170
      %p172 = scmp.ne.s32.totalorder %s164, %s166
      %p173 = scmp.eq.s32.totalorder %s28, 5
      %p174 = por %p172, %p173
      %p175 = scmp.ne.s32.totalorder %s166, %s167
      %p176 = scmp.eq.s32.totalorder %s28, 0
      %p177 = por %p175, %p176
      %p178 = scmp.ne.s32.totalorder %s166, %s167
      %p179 = scmp.eq.s32.totalorder %s29, 5
      %p180 = por %p178, %p179
      %p182 = scmp.ne.s32.totalorder %s167, %s181
      %p183 = scmp.eq.s32.totalorder %s29, 0
      %p184 = por %p182, %p183
      %s186 = sadd.s32 %s185, 1
      %p189 = scmp.eq.s32.totalorder %s23, 5
      %p190 = scmp.ne.s32.totalorder %s185, %s187
      %p191 = scmp.eq.s32.totalorder %s23, 0
      %p192 = por %p190, %p191
      %p193 = scmp.ne.s32.totalorder %s185, %s187
      %p194 = scmp.eq.s32.totalorder %s28, 5
      %p195 = por %p193, %p194
      %p196 = scmp.ne.s32.totalorder %s187, %s188
      %p197 = scmp.eq.s32.totalorder %s28, 0
      %p198 = por %p196, %p197
      %p199 = scmp.ne.s32.totalorder %s187, %s188
      %p200 = scmp.eq.s32.totalorder %s29, 5
      %p201 = por %p199, %p200
      %p203 = scmp.ne.s32.totalorder %s188, %s202
      %p204 = scmp.eq.s32.totalorder %s29, 0
      %p205 = por %p203, %p204
      %s207 = sadd.s32 %s206, 1
      %p210 = scmp.eq.s32.totalorder %s23, 5
      %p211 = scmp.ne.s32.totalorder %s206, %s208
      %p212 = scmp.eq.s32.totalorder %s23, 0
      %p213 = por %p211, %p212
      %p214 = scmp.ne.s32.totalorder %s206, %s208
      %p215 = scmp.eq.s32.totalorder %s28, 5
      %p216 = por %p214, %p215
      %p217 = scmp.ne.s32.totalorder %s208, %s209
      %p218 = scmp.eq.s32.totalorder %s28, 0
      %p219 = por %p217, %p218
      %p220 = scmp.ne.s32.totalorder %s208, %s209
      %p221 = scmp.eq.s32.totalorder %s29, 5
      %p222 = por %p220, %p221
      %p224 = scmp.ne.s32.totalorder %s209, %s223
      %p225 = scmp.eq.s32.totalorder %s29, 0
      %p226 = por %p224, %p225
      %s227 = ssub.s32 %s30, %s42
      %s228 = ssub.s32 %s31, %s38
      %s229 = sor.u32 %s227, %s228
      %p230 = scmp.eq.s32.totalorder %s229, 0
      %s232 = sadd.s32 %s231, 1
      %s233 = scalar_select %p230, %s231, %s232
      %p236 = pneg %p230
      %p237 = scmp.eq.s32.totalorder %s23, 5
      %p238 = por %p236, %p237
      %p239 = scmp.ne.s32.totalorder %s231, %s234
      %p240 = scmp.eq.s32.totalorder %s23, 0
      %p241 = por %p239, %p240
      %p242 = scmp.ne.s32.totalorder %s231, %s234
      %p243 = scmp.eq.s32.totalorder %s28, 5
      %p244 = por %p242, %p243
      %p245 = scmp.ne.s32.totalorder %s234, %s235
      %p246 = scmp.eq.s32.totalorder %s28, 0
      %p247 = por %p245, %p246
      %p248 = scmp.ne.s32.totalorder %s234, %s235
      %p249 = scmp.eq.s32.totalorder %s29, 5
      %p250 = por %p248, %p249
      %p252 = scmp.ne.s32.totalorder %s235, %s251
      %p253 = scmp.eq.s32.totalorder %s29, 0
      %p254 = por %p252, %p253
      %p255 = scmp.le.s32.totalorder 1, %s23
      %p256 = scmp.lt.s32.totalorder %s23, 7
      %p257 = pnand %p255, %p256
      %p258 = pneg %p257
      // Predicated region
      $region9: #{tpu_custom_call.1} parent=5 // pred_check
        _
      $region10: #{tpu_custom_call.1} parent=5 // pred_check_branch
        %260 = sbr.rel (%p257) target = $region12
      $region11: #{tpu_custom_call.1} parent=5 // pred_region
        %s261 = ssub.s32 %s23, 1
        // Predicated region
        $region13: #{tpu_custom_call.1} parent=11 // pred_check
          %p262 = pneg %p156
        $region14: #{tpu_custom_call.1} parent=11 // pred_check_branch
          %264 = sbr.rel (%p262) target = $region16
        $region15: #{tpu_custom_call.1} parent=11 // pred_region
          %s266 = ssub.s32 18432, 18432
          %267 = vsyncadd [#allocation9], %s266
          %s268 = sshll.u32 [#allocation8], 4
          %s269 = int_to_ptr.vmem [resolvable:$true] %s268
          %274 = dma.hbm_to_vmem [thread:$0]  %s3, 18432, %s269, [#allocation9], 128, 128, 8
        $region16: #{tpu_custom_call.1} parent=11 // pred_fallthru
          _
        // Predicated region
        $region17: #{tpu_custom_call.1} parent=11 // pred_check
          %p275 = pneg %p177
        $region18: #{tpu_custom_call.1} parent=11 // pred_check_branch
          %277 = sbr.rel (%p275) target = $region20
        $region19: #{tpu_custom_call.1} parent=11 // pred_region
          _
        $region20: #{tpu_custom_call.1} parent=11 // pred_fallthru
          _
        // Predicated region
        $region21: #{tpu_custom_call.1} parent=11 // pred_check
          %p278 = pneg %p198
        $region22: #{tpu_custom_call.1} parent=11 // pred_check_branch
          %280 = sbr.rel (%p278) target = $region24
        $region23: #{tpu_custom_call.1} parent=11 // pred_region
          %s282 = ssub.s32 18432, 18432
          %283 = vsyncadd [#allocation9], %s282
          %s284 = sshll.u32 [#allocation10], 4
          %s285 = int_to_ptr.vmem [resolvable:$true] %s284
          %290 = dma.hbm_to_vmem [thread:$0]  %s5, 18432, %s285, [#allocation9], 128, 128, 8
        $region24: #{tpu_custom_call.1} parent=11 // pred_fallthru
          _
        // Predicated region
        $region25: #{tpu_custom_call.1} parent=11 // pred_check
          %p291 = pneg %p219
        $region26: #{tpu_custom_call.1} parent=11 // pred_check_branch
          %293 = sbr.rel (%p291) target = $region28
        $region27: #{tpu_custom_call.1} parent=11 // pred_region
          _
        $region28: #{tpu_custom_call.1} parent=11 // pred_fallthru
          _
      $region12: #{tpu_custom_call.1} parent=5 // pred_fallthru
        _
      %p294 = scmp.lt.s32.totalorder %s23, 6
      // Predicated region
      $region29: #{tpu_custom_call.1} parent=5 // pred_check
        %p295 = pneg %p294
      $region30: #{tpu_custom_call.1} parent=5 // pred_check_branch
        %297 = sbr.rel (%p295) target = $region32
      $region31: #{tpu_custom_call.1} parent=5 // pred_region
        // Predicated region
        $region33: #{tpu_custom_call.1} parent=31 // pred_check
          %p298 = pneg %p65
        $region34: #{tpu_custom_call.1} parent=31 // pred_check_branch
          %300 = sbr.rel (%p298) target = $region36
        $region35: #{tpu_custom_call.1} parent=31 // pred_region
          %s301 = sand.u32 %s55, 1
          %s302 = scalar_lea.sflag [#allocation3], %s301
          %s303 = sand.u32 %s55, 1
          %s304 = smul.addr %s303, 16
          %s305 = scalar_lea.vmem [#allocation2], %s304
          %s306 = smul.u32 %s31, 2
          %s307 = ssub.s32 %s306, 1
          %p308 = scmp.gt.s32.totalorder %s307, 0
          %s309 = scalar_select %p308, %s307, 0
          %s310 = smul.u32 2, %s309
          %s312 = ssub.s32 256, 256
          %313 = vsyncadd %s302, %s312
          %s314 = smul.addr %s30, 12
          %s315 = sadd.s32 %s310, %s314
          %s316 = smul.addr %s315, 128
          %s317 = scalar_lea.hbm %s0, %s316
          %s318 = sshll.u32 %s305, 4
          %s319 = int_to_ptr.vmem [resolvable:$true] %s318
          %324 = dma.hbm_to_vmem [thread:$0]  %s317, 256, %s319, %s302, 128, 128, 8
        $region36: #{tpu_custom_call.1} parent=31 // pred_fallthru
          _
        // Predicated region
        $region37: #{tpu_custom_call.1} parent=31 // pred_check
          %p325 = pneg %p93
        $region38: #{tpu_custom_call.1} parent=31 // pred_check_branch
          %327 = sbr.rel (%p325) target = $region40
        $region39: #{tpu_custom_call.1} parent=31 // pred_region
          %s328 = sand.u32 %s23, 1
          %s329 = scalar_lea.sflag [#allocation6], %s328
          %s330 = sand.u32 %s83, 1
          %s331 = smul.addr %s330, 32
          %s332 = scalar_lea.vmem [#allocation5], %s331
          %s333 = smul.u32 4, %s31
          %s335 = ssub.s32 512, 512
          %336 = vsyncadd %s329, %s335
          %s337 = smul.addr %s30, 12
          %s338 = sadd.s32 %s333, %s337
          %s339 = smul.addr %s338, 128
          %s340 = scalar_lea.hbm %s1, %s339
          %s341 = sshll.u32 %s332, 4
          %s342 = int_to_ptr.vmem [resolvable:$true] %s341
          %347 = dma.hbm_to_vmem [thread:$0]  %s340, 512, %s342, %s329, 128, 128, 8
        $region40: #{tpu_custom_call.1} parent=31 // pred_fallthru
          _
        // Predicated region
        $region41: #{tpu_custom_call.1} parent=31 // pred_check
          %p348 = pneg %p129
        $region42: #{tpu_custom_call.1} parent=31 // pred_check_branch
          %350 = sbr.rel (%p348) target = $region44
        $region43: #{tpu_custom_call.1} parent=31 // pred_region
          %s351 = sand.u32 %s23, 1
          %s352 = scalar_lea.sflag [#allocation6], %s351
          %s353 = sand.u32 %s119, 1
          %s354 = smul.addr %s353, 16
          %s355 = scalar_lea.vmem [#allocation7], %s354
          %s356 = sadd.s32 %s31, 1
          %s357 = smul.u32 %s356, 2
          %p358 = scmp.lt.s32.totalorder %s357, 5
          %s359 = scalar_select %p358, %s357, 5
          %s360 = smul.u32 2, %s359
          %s362 = ssub.s32 256, 256
          %363 = vsyncadd %s352, %s362
          %s364 = smul.addr %s30, 12
          %s365 = sadd.s32 %s360, %s364
          %s366 = smul.addr %s365, 128
          %s367 = scalar_lea.hbm %s2, %s366
          %s368 = sshll.u32 %s355, 4
          %s369 = int_to_ptr.vmem [resolvable:$true] %s368
          %374 = dma.hbm_to_vmem [thread:$0]  %s367, 256, %s369, %s352, 128, 128, 8
        $region44: #{tpu_custom_call.1} parent=31 // pred_fallthru
          _
      $region32: #{tpu_custom_call.1} parent=5 // pred_fallthru
        _
      %p375 = scmp.le.s32.totalorder 1, %s23
      %p376 = scmp.lt.s32.totalorder %s23, 7
      %p377 = pnand %p375, %p376
      %p378 = pneg %p377
      // Predicated region
      $region45: #{tpu_custom_call.1} parent=5 // pred_check
        _
      $region46: #{tpu_custom_call.1} parent=5 // pred_check_branch
        %380 = sbr.rel (%p377) target = $region48
      $region47: #{tpu_custom_call.1} parent=5 // pred_region
        %s381 = ssub.s32 %s23, 1
        %s382 = sand.u32 %s58, 1
        %s383 = scalar_lea.sflag [#allocation3], %s382
        %s384 = sand.u32 %s58, 1
        %s385 = smul.addr %s384, 16
        %s386 = scalar_lea.vmem [#allocation2], %s385
        // Predicated region
        $region49: #{tpu_custom_call.1} parent=47 // pred_check
          %p387 = pneg %p71
        $region50: #{tpu_custom_call.1} parent=47 // pred_check_branch
          %389 = sbr.rel (%p387) target = $region52
        $region51: #{tpu_custom_call.1} parent=47 // pred_region
          %390 = dma.done %s383, 256
        $region52: #{tpu_custom_call.1} parent=47 // pred_fallthru
          _
        %s391 = sand.u32 %s28, 1
        %s392 = scalar_lea.sflag [#allocation6], %s391
        %s393 = sand.u32 %s86, 1
        %s394 = smul.addr %s393, 32
        %s395 = scalar_lea.vmem [#allocation5], %s394
        // Predicated region
        $region53: #{tpu_custom_call.1} parent=47 // pred_check
          %p396 = pneg %p99
        $region54: #{tpu_custom_call.1} parent=47 // pred_check_branch
          %398 = sbr.rel (%p396) target = $region56
        $region55: #{tpu_custom_call.1} parent=47 // pred_region
          %399 = dma.done %s392, 512
        $region56: #{tpu_custom_call.1} parent=47 // pred_fallthru
          _
        %s400 = sand.u32 %s28, 1
        %s401 = scalar_lea.sflag [#allocation6], %s400
        %s402 = sand.u32 %s122, 1
        %s403 = smul.addr %s402, 16
        %s404 = scalar_lea.vmem [#allocation7], %s403
        // Predicated region
        $region57: #{tpu_custom_call.1} parent=47 // pred_check
          %p405 = pneg %p135
        $region58: #{tpu_custom_call.1} parent=47 // pred_check_branch
          %407 = sbr.rel (%p405) target = $region60
        $region59: #{tpu_custom_call.1} parent=47 // pred_region
          %408 = dma.done %s401, 256
        $region60: #{tpu_custom_call.1} parent=47 // pred_fallthru
          _
        // Predicated region
        $region61: #{tpu_custom_call.1} parent=47 // pred_check
          %p409 = pneg %p156
        $region62: #{tpu_custom_call.1} parent=47 // pred_check_branch
          %411 = sbr.rel (%p409) target = $region64
        $region63: #{tpu_custom_call.1} parent=47 // pred_region
          %412 = dma.done [#allocation9], 18432
        $region64: #{tpu_custom_call.1} parent=47 // pred_fallthru
          _
        // Predicated region
        $region65: #{tpu_custom_call.1} parent=47 // pred_check
          %p413 = pneg %p198
        $region66: #{tpu_custom_call.1} parent=47 // pred_check_branch
          %415 = sbr.rel (%p413) target = $region68
        $region67: #{tpu_custom_call.1} parent=47 // pred_region
          %416 = dma.done [#allocation9], 18432
        $region68: #{tpu_custom_call.1} parent=47 // pred_fallthru
          _
        %s417 = sand.u32 %s58, 1
        %s418 = scalar_lea.sflag [#allocation3], %s417
        %s419 = sand.u32 %s58, 1
        %s420 = smul.addr %s419, 16
        %s421 = scalar_lea.vmem [#allocation2], %s420
        %p422 = pneg %p71
        %p423 = pneg %p68
        %s424 = sand.u32 %s28, 1
        %s425 = scalar_lea.sflag [#allocation6], %s424
        %s426 = sand.u32 %s86, 1
        %s427 = smul.addr %s426, 32
        %s428 = scalar_lea.vmem [#allocation5], %s427
        %p429 = pneg %p99
        %p430 = pneg %p96
        %s431 = sand.u32 %s28, 1
        %s432 = scalar_lea.sflag [#allocation6], %s431
        %s433 = sand.u32 %s122, 1
        %s434 = smul.addr %s433, 16
        %s435 = scalar_lea.vmem [#allocation7], %s434
        %p436 = pneg %p135
        %p437 = pneg %p132
        %p438 = pneg %p156
        %p439 = pneg %p153
        %p440 = pneg %p177
        %p441 = pneg %p174
        %p442 = pneg %p198
        %p443 = pneg %p195
        %p444 = pneg %p219
        %p445 = pneg %p216
        %p446 = pneg %p247
        %p447 = pneg %p244
        %s448 = sand.u32 %s234, 1
        %s449 = scalar_lea.sflag [#allocation4], %s448
        %s450 = sand.u32 %s234, 1
        %s451 = smul.addr %s450, 32
        %s452 = scalar_lea.vmem [#allocation11], %s451
        %s453 = smul.u32 %s33, 2
        %s454 = ssub.s32 %s453, 1
        %p455 = scmp.gt.s32.totalorder %s454, 0
        %s456 = scalar_select %p455, %s454, 0
        %s457 = smul.u32 2, %s456
        %s458 = smul.u32 4, %s33
        %s459 = sadd.s32 %s33, 1
        %s460 = smul.u32 %s459, 2
        %p461 = scmp.lt.s32.totalorder %s460, 5
        %s462 = scalar_select %p461, %s460, 5
        %s463 = smul.u32 2, %s462
        %s464 = smul.u32 4, %s33
        %v465 = vld [vmem:[%s386] sm:$0xff]
        %v466 = vld [vmem:[%s386 + $0x8] sm:$0xff]
        %v467 = vld [vmem:[%s395] sm:$0xff]
        %v468 = vld [vmem:[%s395 + $0x8] sm:$0xff]
        %v469 = vld [vmem:[%s395 + $0x10] sm:$0xff]
        %v470 = vld [vmem:[%s395 + $0x18] sm:$0xff]
        %v471 = vld [vmem:[%s404] sm:$0xff]
        %v472 = vld [vmem:[%s404 + $0x8] sm:$0xff]
        %v473 = vlaneseq
        %v474 = vshrl.u32 %v473, 7
        %v475 = vadd.s32 %v474, 8
        %v476 = vadd.s32 %v474, 16
        %v477 = vadd.s32 %v474, 24
        %v478 = vadd.s32 %v474, 32
        %v479 = vadd.s32 %v474, 40
        %v480 = vadd.s32 %v474, 48
        %v481 = vadd.s32 %v474, 56
        %s482 = smul.u32 %s33, 32
        %s483 = ssub.s32 %s482, 16
        %v484 = vstv %s483
        %v485 = vadd.s32 %v484, %v474
        %v486 = vadd.s32 %v484, %v475
        %v487 = vadd.s32 %v484, %v476
        %v488 = vadd.s32 %v484, %v477
        %v489 = vadd.s32 %v484, %v478
        %v490 = vadd.s32 %v484, %v479
        %v491 = vadd.s32 %v484, %v480
        %v492 = vadd.s32 %v484, %v481
        %vm493 = vcmp.ge.s32.totalorder %v485, 0
        %vm494 = vcmp.ge.s32.totalorder %v486, 0
        %vm495 = vcmp.ge.s32.totalorder %v487, 0
        %vm496 = vcmp.ge.s32.totalorder %v488, 0
        %vm497 = vcmp.ge.s32.totalorder %v489, 0
        %vm498 = vcmp.ge.s32.totalorder %v490, 0
        %vm499 = vcmp.ge.s32.totalorder %v491, 0
        %vm500 = vcmp.ge.s32.totalorder %v492, 0
        %vm501 = vcmp.lt.s32.totalorder %v485, 80
        %vm502 = vcmp.lt.s32.totalorder %v486, 80
        %vm503 = vcmp.lt.s32.totalorder %v487, 80
        %vm504 = vcmp.lt.s32.totalorder %v488, 80
        %vm505 = vcmp.lt.s32.totalorder %v489, 80
        %vm506 = vcmp.lt.s32.totalorder %v490, 80
        %vm507 = vcmp.lt.s32.totalorder %v491, 80
        %vm508 = vcmp.lt.s32.totalorder %v492, 80
        %vm509 = vmand %vm493, %vm501
        %vm510 = vmand %vm494, %vm502
        %vm511 = vmand %vm495, %vm503
        %vm512 = vmand %vm496, %vm504
        %vm513 = vmand %vm497, %vm505
        %vm514 = vmand %vm498, %vm506
        %vm515 = vmand %vm499, %vm507
        %vm516 = vmand %vm500, %vm508
        %v517 = vsel %vm509, 1, 0
        %v518 = vsel %vm510, 1, 0
        %v519 = vsel %vm511, 1, 0
        %v520 = vsel %vm512, 1, 0
        %v521 = vsel %vm513, 1, 0
        %v522 = vsel %vm514, 1, 0
        %v523 = vsel %vm515, 1, 0
        %v524 = vsel %vm516, 1, 0
        %v525 = vcvt.s32.f32 %v517
        %v526 = vcvt.s32.f32 %v518
        %v527 = vcvt.s32.f32 %v519
        %v528 = vcvt.s32.f32 %v520
        %v529 = vcvt.s32.f32 %v521
        %v530 = vcvt.s32.f32 %v522
        %v531 = vcvt.s32.f32 %v523
        %v532 = vcvt.s32.f32 %v524
        %v533 = vld [vmem:[%s4] sm:$0x1]
        %v534 = vld [vmem:[%s4 + $0x1] sm:$0x1]
        %v535 = vld [vmem:[%s4 + $0x2] sm:$0x1]
        %v536 = vld [vmem:[%s6] sm:$0x1]
        %v537 = vld [vmem:[%s6 + $0x1] sm:$0x1]
        %v538 = vld [vmem:[%s6 + $0x2] sm:$0x1]
        %vm539 = vcmp.gt.f32.partialorder %v465, 0.0
        %vm540 = vcmp.gt.f32.partialorder %v466, 0.0
        %vm541 = vcmp.gt.f32.partialorder %v467, 0.0
        %vm542 = vcmp.gt.f32.partialorder %v468, 0.0
        %vm543 = vcmp.gt.f32.partialorder %v469, 0.0
        %vm544 = vcmp.gt.f32.partialorder %v470, 0.0
        %vm545 = vcmp.gt.f32.partialorder %v471, 0.0
        %vm546 = vcmp.gt.f32.partialorder %v472, 0.0
        %v547 = vmul.f32 %v465, 0.1
        %v548 = vmul.f32 %v466, 0.1
        %v549 = vmul.f32 %v467, 0.1
        %v550 = vmul.f32 %v468, 0.1
        %v551 = vmul.f32 %v469, 0.1
        %v552 = vmul.f32 %v470, 0.1
        %v553 = vmul.f32 %v471, 0.1
        %v554 = vmul.f32 %v472, 0.1
        %v555 = vsel %vm539, %v465, %v547
        %v556 = vsel %vm540, %v466, %v548
        %v557 = vsel %vm541, %v467, %v549
        %v558 = vsel %vm542, %v468, %v550
        %v559 = vsel %vm543, %v469, %v551
        %v560 = vsel %vm544, %v470, %v552
        %v561 = vsel %vm545, %v471, %v553
        %v562 = vsel %vm546, %v472, %v554
        %v563 = vld [vmem:[#allocation8] sm:$0xff]
        %v564 = vld [vmem:[#allocation8 + $0x8] sm:$0xff]
        %v565 = vld [vmem:[#allocation8 + $0x10] sm:$0xff]
        %v566 = vld [vmem:[#allocation8 + $0x18] sm:$0xff]
        %v567 = vld [vmem:[#allocation8 + $0x20] sm:$0xff]
        %v568 = vld [vmem:[#allocation8 + $0x28] sm:$0xff]
        %v569 = vld [vmem:[#allocation8 + $0x30] sm:$0xff]
        %v570 = vld [vmem:[#allocation8 + $0x38] sm:$0xff]
        %v571 = vld [vmem:[#allocation8 + $0x40] sm:$0xff]
        %v572 = vld [vmem:[#allocation8 + $0x48] sm:$0xff]
        %v573 = vld [vmem:[#allocation8 + $0x50] sm:$0xff]
        %v574 = vld [vmem:[#allocation8 + $0x58] sm:$0xff]
        %v575 = vld [vmem:[#allocation8 + $0x60] sm:$0xff]
        %v576 = vld [vmem:[#allocation8 + $0x68] sm:$0xff]
        %v577 = vld [vmem:[#allocation8 + $0x70] sm:$0xff]
        %v578 = vld [vmem:[#allocation8 + $0x78] sm:$0xff]
        %v579 = vld [vmem:[#allocation8 + $0x80] sm:$0xff]
        %v580 = vld [vmem:[#allocation8 + $0x88] sm:$0xff]
        %v581 = vld [vmem:[#allocation8 + $0x90] sm:$0xff]
        %v582 = vld [vmem:[#allocation8 + $0x98] sm:$0xff]
        %v583 = vld [vmem:[#allocation8 + $0xa0] sm:$0xff]
        %v584 = vld [vmem:[#allocation8 + $0xa8] sm:$0xff]
        %v585 = vld [vmem:[#allocation8 + $0xb0] sm:$0xff]
        %v586 = vld [vmem:[#allocation8 + $0xb8] sm:$0xff]
        %v587 = vld [vmem:[#allocation8 + $0xc0] sm:$0xff]
        %v588 = vld [vmem:[#allocation8 + $0xc8] sm:$0xff]
        %v589 = vld [vmem:[#allocation8 + $0xd0] sm:$0xff]
        %v590 = vld [vmem:[#allocation8 + $0xd8] sm:$0xff]
        %v591 = vld [vmem:[#allocation8 + $0xe0] sm:$0xff]
        %v592 = vld [vmem:[#allocation8 + $0xe8] sm:$0xff]
        %v593 = vld [vmem:[#allocation8 + $0xf0] sm:$0xff]
        %v594 = vld [vmem:[#allocation8 + $0xf8] sm:$0xff]
        %v595 = vld [vmem:[#allocation8 + $0x100] sm:$0xff]
        %v596 = vld [vmem:[#allocation8 + $0x108] sm:$0xff]
        %v597 = vld [vmem:[#allocation8 + $0x110] sm:$0xff]
        %v598 = vld [vmem:[#allocation8 + $0x118] sm:$0xff]
        %v599 = vld [vmem:[#allocation8 + $0x120] sm:$0xff]
        %v600 = vld [vmem:[#allocation8 + $0x128] sm:$0xff]
        %v601 = vld [vmem:[#allocation8 + $0x130] sm:$0xff]
        %v602 = vld [vmem:[#allocation8 + $0x138] sm:$0xff]
        %v603 = vld [vmem:[#allocation8 + $0x140] sm:$0xff]
        %v604 = vld [vmem:[#allocation8 + $0x148] sm:$0xff]
        %v605 = vld [vmem:[#allocation8 + $0x150] sm:$0xff]
        %v606 = vld [vmem:[#allocation8 + $0x158] sm:$0xff]
        %v607 = vld [vmem:[#allocation8 + $0x160] sm:$0xff]
        %v608 = vld [vmem:[#allocation8 + $0x168] sm:$0xff]
        %v609 = vld [vmem:[#allocation8 + $0x170] sm:$0xff]
        %v610 = vld [vmem:[#allocation8 + $0x178] sm:$0xff]
        %v611 = vmul.f32 %v555, %v525
        %v612 = vmul.f32 %v556, %v526
        %v613 = vmul.f32 %v557, %v527
        %v614 = vmul.f32 %v558, %v528
        %v615 = vmul.f32 %v559, %v529
        %v616 = vmul.f32 %v560, %v530
        %v617 = vmul.f32 %v561, %v531
        %v618 = vmul.f32 %v562, %v532
        %v619 = vrot.slane %v611, 7
        %v620 = vrot.slane %v612, 7
        %v621 = vrot.slane %v613, 7
        %v622 = vrot.slane %v614, 7
        %v623 = vrot.slane %v615, 7
        %v624 = vrot.slane %v616, 7
        %v625 = vrot.slane %v617, 7
        %v626 = vrot.slane %v618, 7
        %vm627 = vcmp.lt.s32.totalorder %v474, 1
        %v628 = vsel %vm627, %v625, %v626
        %v629 = vsel %vm627, %v624, %v625
        %v630 = vsel %vm627, %v623, %v624
        %v631 = vsel %vm627, %v622, %v623
        %v632 = vsel %vm627, %v621, %v622
        %v633 = vsel %vm627, %v620, %v621
        %v634 = vsel %vm627, %v619, %v620
        %v635 = vsel %vm627, %v626, %v619
        %v636 = vrot.slane %v611, 1
        %v637 = vrot.slane %v612, 1
        %v638 = vrot.slane %v613, 1
        %v639 = vrot.slane %v614, 1
        %v640 = vrot.slane %v615, 1
        %v641 = vrot.slane %v616, 1
        %v642 = vrot.slane %v617, 1
        %v643 = vrot.slane %v618, 1
        %vm644 = vcmp.lt.s32.totalorder %v474, 7
        %v645 = vsel %vm644, %v642, %v643
        %v646 = vsel %vm644, %v641, %v642
        %v647 = vsel %vm644, %v640, %v641
        %v648 = vsel %vm644, %v639, %v640
        %v649 = vsel %vm644, %v638, %v639
        %v650 = vsel %vm644, %v637, %v638
        %v651 = vsel %vm644, %v636, %v637
        %v652 = vsel %vm644, %v643, %v636
        %v654 = vlaneseq
        %v655 = vshrl.u32 %v654, 7
        %v656 = vsub.s32 0, %v655
        %v657 = vrot.slane %v533, %v656
        %659 = vmatprep.subr.mxu0 0.0
        %660 = vmatpush1.msra.mxu0 %v563
        %661 = vmatprep.subr.mxu0 0.0
        %662 = vmatpush1.msra.mxu0 %v564
        %663 = vmatprep.subr.mxu0 0.0
        %664 = vmatpush1.msra.mxu0 %v565
        %665 = vmatprep.subr.mxu0 0.0
        %666 = vmatpush1.msra.mxu0 %v566
        %667 = vmatprep.subr.mxu0 0.0
        %668 = vmatpush1.msra.mxu0 %v567
        %669 = vmatprep.subr.mxu0 0.0
        %670 = vmatpush1.msra.mxu0 %v568
        %671 = vmatprep.subr.mxu0 0.0
        %672 = vmatpush1.msra.mxu0 %v569
        %673 = vmatprep.subr.mxu0 0.0
        %674 = vmatpush1.msra.mxu0 %v570
        %675 = vmatprep.subr.mxu0 0.0
        %676 = vmatpush1.msra.mxu0 %v571
        %677 = vmatprep.subr.mxu0 0.0
        %678 = vmatpush1.msra.mxu0 %v572
        %679 = vmatprep.subr.mxu0 0.0
        %680 = vmatpush1.msra.mxu0 %v573
        %681 = vmatprep.subr.mxu0 0.0
        %682 = vmatpush1.msra.mxu0 %v574
        %683 = vmatprep.subr.mxu0 0.0
        %684 = vmatpush1.msra.mxu0 %v575
        %685 = vmatprep.subr.mxu0 0.0
        %686 = vmatpush1.msra.mxu0 %v576
        %687 = vmatprep.subr.mxu0 0.0
        %688 = vmatpush1.msra.mxu0 %v577
        %689 = vmatprep.subr.mxu0 0.0
        %690 = vmatpush1.msra.mxu0 %v578
        %691 = vmatprep.subr.mxu0 0.0
        %692 = vmatpush1.msra.mxu0 %v579
        %693 = vmatprep.subr.mxu0 0.0
        %694 = vmatpush1.msra.mxu0 %v580
        %695 = vmatprep.subr.mxu0 0.0
        %696 = vmatpush1.msra.mxu0 %v581
        %697 = vmatprep.subr.mxu0 0.0
        %698 = vmatpush1.msra.mxu0 %v582
        %699 = vmatprep.subr.mxu0 0.0
        %700 = vmatpush1.msra.mxu0 %v583
        %701 = vmatprep.subr.mxu0 0.0
        %702 = vmatpush1.msra.mxu0 %v584
        %703 = vmatprep.subr.mxu0 0.0
        %704 = vmatpush1.msra.mxu0 %v585
        %705 = vmatprep.subr.mxu0 0.0
        %706 = vmatpush1.msra.mxu0 %v586
        %707 = vmatprep.subr.mxu0 0.0
        %708 = vmatpush1.msra.mxu0 %v587
        %709 = vmatprep.subr.mxu0 0.0
        %710 = vmatpush1.msra.mxu0 %v588
        %711 = vmatprep.subr.mxu0 0.0
        %712 = vmatpush1.msra.mxu0 %v589
        %713 = vmatprep.subr.mxu0 0.0
        %714 = vmatpush1.msra.mxu0 %v590
        %715 = vmatprep.subr.mxu0 0.0
        %716 = vmatpush1.msra.mxu0 %v591
        %717 = vmatprep.subr.mxu0 0.0
        %718 = vmatpush1.msra.mxu0 %v592
        %719 = vmatprep.subr.mxu0 0.0
        %720 = vmatpush1.msra.mxu0 %v593
        %721 = vmatprep.subr.mxu0 0.0
        %722 = vmatpush1.msra.mxu0 %v594
        %723 = vmatprep.mubr.f32.mxu0 %v611
        %724 = vmatmul.mubr.f32.gmra.mrb[0].mxu0 %v635
        %v725 = vpop.f32.mrb[0].mxu0
        %v726 = vadd.f32 %v657, %v725
        %v727 = vpop.f32.mrb[0].mxu0
        %728 = vmatprep.mubr.f32.mxu0 %v612
        %729 = vmatmul.mubr.f32.gmra.mrb[0].mxu0 %v634
        %v730 = vpop.f32.mrb[0].mxu0
        %v731 = vadd.f32 %v657, %v730
        %v732 = vpop.f32.mrb[0].mxu0
        %733 = vmatprep.mubr.f32.mxu0 %v613
        %734 = vmatmul.mubr.f32.gmra.mrb[0].mxu0 %v633
        %v735 = vpop.f32.mrb[0].mxu0
        %v736 = vadd.f32 %v657, %v735
        %v737 = vpop.f32.mrb[0].mxu0
        %738 = vmatprep.mubr.f32.mxu0 %v614
        %739 = vmatmul.mubr.f32.gmra.mrb[0].mxu0 %v632
        %v740 = vpop.f32.mrb[0].mxu0
        %v741 = vadd.f32 %v657, %v740
        %v742 = vpop.f32.mrb[0].mxu0
        %743 = vmatprep.mubr.f32.mxu0 %v615
        %744 = vmatmul.mubr.f32.gmra.mrb[0].mxu0 %v631
        %v745 = vpop.f32.mrb[0].mxu0
        %v746 = vadd.f32 %v657, %v745
        %v747 = vpop.f32.mrb[0].mxu0
        %748 = vmatprep.mubr.f32.mxu0 %v616
        %749 = vmatmul.mubr.f32.gmra.mrb[0].mxu0 %v630
        %v750 = vpop.f32.mrb[0].mxu0
        %v751 = vadd.f32 %v657, %v750
        %v752 = vpop.f32.mrb[0].mxu0
        %753 = vmatprep.mubr.f32.mxu0 %v617
        %754 = vmatmul.mubr.f32.gmra.mrb[0].mxu0 %v629
        %v755 = vpop.f32.mrb[0].mxu0
        %v756 = vadd.f32 %v657, %v755
        %v757 = vpop.f32.mrb[0].mxu0
        %758 = vmatprep.mubr.f32.mxu0 %v618
        %759 = vmatmul.mubr.f32.gmra.mrb[0].mxu0 %v628
        %v760 = vpop.f32.mrb[0].mxu0
        %v761 = vadd.f32 %v657, %v760
        %v762 = vpop.f32.mrb[0].mxu0
        %763 = vdwg.mxu0
        %764 = vmatprep.subr.mxu0 0.0
        %765 = vmatpush1.msra.mxu0 %v595
        %766 = vmatprep.subr.mxu0 0.0
        %767 = vmatpush1.msra.mxu0 %v596
        %768 = vmatprep.subr.mxu0 0.0
        %769 = vmatpush1.msra.mxu0 %v597
        %770 = vmatprep.subr.mxu0 0.0
        %771 = vmatpush1.msra.mxu0 %v598
        %772 = vmatprep.subr.mxu0 0.0
        %773 = vmatpush1.msra.mxu0 %v599
        %774 = vmatprep.subr.mxu0 0.0
        %775 = vmatpush1.msra.mxu0 %v600
        %776 = vmatprep.subr.mxu0 0.0
        %777 = vmatpush1.msra.mxu0 %v601
        %778 = vmatprep.subr.mxu0 0.0
        %779 = vmatpush1.msra.mxu0 %v602
        %780 = vmatprep.subr.mxu0 0.0
        %781 = vmatpush1.msra.mxu0 %v603
        %782 = vmatprep.subr.mxu0 0.0
        %783 = vmatpush1.msra.mxu0 %v604
        %784 = vmatprep.subr.mxu0 0.0
        %785 = vmatpush1.msra.mxu0 %v605
        %786 = vmatprep.subr.mxu0 0.0
        %787 = vmatpush1.msra.mxu0 %v606
        %788 = vmatprep.subr.mxu0 0.0
        %789 = vmatpush1.msra.mxu0 %v607
        %790 = vmatprep.subr.mxu0 0.0
        %791 = vmatpush1.msra.mxu0 %v608
        %792 = vmatprep.subr.mxu0 0.0
        %793 = vmatpush1.msra.mxu0 %v609
        %794 = vmatprep.subr.mxu0 0.0
        %795 = vmatpush1.msra.mxu0 %v610
        %796 = vmatprep.subr.mxu0 0.0
        %797 = vmatpush1.msra.mxu0 0.0
        %798 = vmatprep.subr.mxu0 0.0
        %799 = vmatpush1.msra.mxu0 0.0
        %800 = vmatprep.subr.mxu0 0.0
        %801 = vmatpush1.msra.mxu0 0.0
        %802 = vmatprep.subr.mxu0 0.0
        %803 = vmatpush1.msra.mxu0 0.0
        %804 = vmatprep.subr.mxu0 0.0
        %805 = vmatpush1.msra.mxu0 0.0
        %806 = vmatprep.subr.mxu0 0.0
        %807 = vmatpush1.msra.mxu0 0.0
        %808 = vmatprep.subr.mxu0 0.0
        %809 = vmatpush1.msra.mxu0 0.0
        %810 = vmatprep.subr.mxu0 0.0
        %811 = vmatpush1.msra.mxu0 0.0
        %812 = vmatprep.subr.mxu0 0.0
        %813 = vmatpush1.msra.mxu0 0.0
        %814 = vmatprep.subr.mxu0 0.0
        %815 = vmatpush1.msra.mxu0 0.0
        %816 = vmatprep.subr.mxu0 0.0
        %817 = vmatpush1.msra.mxu0 0.0
        %818 = vmatprep.subr.mxu0 0.0
        %819 = vmatpush1.msra.mxu0 0.0
        %820 = vmatprep.subr.mxu0 0.0
        %821 = vmatpush1.msra.mxu0 0.0
        %822 = vmatprep.subr.mxu0 0.0
        %823 = vmatpush1.msra.mxu0 0.0
        %824 = vmatprep.subr.mxu0 0.0
        %825 = vmatpush1.msra.mxu0 0.0
        %826 = vmatprep.subr.mxu0 0.0
        %827 = vmatpush1.msra.mxu0 0.0
        %828 = vmatprep.mubr.f32.mxu0 0.0
        %829 = vmatmul.mubr.f32.gmra.mrb[0].mxu0 %v651
        %v830 = vpop.f32.mrb[0].mxu0
        %v831 = vadd.f32 %v726, %v830
        %v832 = vpop.f32.mrb[0].mxu0
        %833 = vmatprep.mubr.f32.mxu0 0.0
        %834 = vmatmul.mubr.f32.gmra.mrb[0].mxu0 %v650
        %v835 = vpop.f32.mrb[0].mxu0
        %v836 = vadd.f32 %v731, %v835
        %v837 = vpop.f32.mrb[0].mxu0
        %838 = vmatprep.mubr.f32.mxu0 0.0
        %839 = vmatmul.mubr.f32.gmra.mrb[0].mxu0 %v649
        %v840 = vpop.f32.mrb[0].mxu0
        %v841 = vadd.f32 %v736, %v840
        %v842 = vpop.f32.mrb[0].mxu0
        %843 = vmatprep.mubr.f32.mxu0 0.0
        %844 = vmatmul.mubr.f32.gmra.mrb[0].mxu0 %v648
        %v845 = vpop.f32.mrb[0].mxu0
        %v846 = vadd.f32 %v741, %v845
        %v847 = vpop.f32.mrb[0].mxu0
        %848 = vmatprep.mubr.f32.mxu0 0.0
        %849 = vmatmul.mubr.f32.gmra.mrb[0].mxu0 %v647
        %v850 = vpop.f32.mrb[0].mxu0
        %v851 = vadd.f32 %v746, %v850
        %v852 = vpop.f32.mrb[0].mxu0
        %853 = vmatprep.mubr.f32.mxu0 0.0
        %854 = vmatmul.mubr.f32.gmra.mrb[0].mxu0 %v646
        %v855 = vpop.f32.mrb[0].mxu0
        %v856 = vadd.f32 %v751, %v855
        %v857 = vpop.f32.mrb[0].mxu0
        %858 = vmatprep.mubr.f32.mxu0 0.0
        %859 = vmatmul.mubr.f32.gmra.mrb[0].mxu0 %v645
        %v860 = vpop.f32.mrb[0].mxu0
        %v861 = vadd.f32 %v756, %v860
        %v862 = vpop.f32.mrb[0].mxu0
        %863 = vmatprep.mubr.f32.mxu0 0.0
        %864 = vmatmul.mubr.f32.gmra.mrb[0].mxu0 %v652
        %v865 = vpop.f32.mrb[0].mxu0
        %v866 = vadd.f32 %v761, %v865
        %v867 = vpop.f32.mrb[0].mxu0
        %868 = vdwg.mxu0
        %vm869 = vcmp.gt.f32.partialorder %v831, 0.0
        %vm870 = vcmp.gt.f32.partialorder %v836, 0.0
        %vm871 = vcmp.gt.f32.partialorder %v841, 0.0
        %vm872 = vcmp.gt.f32.partialorder %v846, 0.0
        %vm873 = vcmp.gt.f32.partialorder %v851, 0.0
        %vm874 = vcmp.gt.f32.partialorder %v856, 0.0
        %vm875 = vcmp.gt.f32.partialorder %v861, 0.0
        %vm876 = vcmp.gt.f32.partialorder %v866, 0.0
        %v877 = vmul.f32 %v831, 0.1
        %v878 = vmul.f32 %v836, 0.1
        %v879 = vmul.f32 %v841, 0.1
        %v880 = vmul.f32 %v846, 0.1
        %v881 = vmul.f32 %v851, 0.1
        %v882 = vmul.f32 %v856, 0.1
        %v883 = vmul.f32 %v861, 0.1
        %v884 = vmul.f32 %v866, 0.1
        %v885 = vsel %vm869, %v831, %v877
        %v886 = vsel %vm870, %v836, %v878
        %v887 = vsel %vm871, %v841, %v879
        %v888 = vsel %vm872, %v846, %v880
        %v889 = vsel %vm873, %v851, %v881
        %v890 = vsel %vm874, %v856, %v882
        %v891 = vsel %vm875, %v861, %v883
        %v892 = vsel %vm876, %v866, %v884
        %v893 = vld [vmem:[#allocation10] sm:$0xff]
        %v894 = vld [vmem:[#allocation10 + $0x8] sm:$0xff]
        %v895 = vld [vmem:[#allocation10 + $0x10] sm:$0xff]
        %v896 = vld [vmem:[#allocation10 + $0x18] sm:$0xff]
        %v897 = vld [vmem:[#allocation10 + $0x20] sm:$0xff]
        %v898 = vld [vmem:[#allocation10 + $0x28] sm:$0xff]
        %v899 = vld [vmem:[#allocation10 + $0x30] sm:$0xff]
        %v900 = vld [vmem:[#allocation10 + $0x38] sm:$0xff]
        %v901 = vld [vmem:[#allocation10 + $0x40] sm:$0xff]
        %v902 = vld [vmem:[#allocation10 + $0x48] sm:$0xff]
        %v903 = vld [vmem:[#allocation10 + $0x50] sm:$0xff]
        %v904 = vld [vmem:[#allocation10 + $0x58] sm:$0xff]
        %v905 = vld [vmem:[#allocation10 + $0x60] sm:$0xff]
        %v906 = vld [vmem:[#allocation10 + $0x68] sm:$0xff]
        %v907 = vld [vmem:[#allocation10 + $0x70] sm:$0xff]
        %v908 = vld [vmem:[#allocation10 + $0x78] sm:$0xff]
        %v909 = vld [vmem:[#allocation10 + $0x80] sm:$0xff]
        %v910 = vld [vmem:[#allocation10 + $0x88] sm:$0xff]
        %v911 = vld [vmem:[#allocation10 + $0x90] sm:$0xff]
        %v912 = vld [vmem:[#allocation10 + $0x98] sm:$0xff]
        %v913 = vld [vmem:[#allocation10 + $0xa0] sm:$0xff]
        %v914 = vld [vmem:[#allocation10 + $0xa8] sm:$0xff]
        %v915 = vld [vmem:[#allocation10 + $0xb0] sm:$0xff]
        %v916 = vld [vmem:[#allocation10 + $0xb8] sm:$0xff]
        %v917 = vld [vmem:[#allocation10 + $0xc0] sm:$0xff]
        %v918 = vld [vmem:[#allocation10 + $0xc8] sm:$0xff]
        %v919 = vld [vmem:[#allocation10 + $0xd0] sm:$0xff]
        %v920 = vld [vmem:[#allocation10 + $0xd8] sm:$0xff]
        %v921 = vld [vmem:[#allocation10 + $0xe0] sm:$0xff]
        %v922 = vld [vmem:[#allocation10 + $0xe8] sm:$0xff]
        %v923 = vld [vmem:[#allocation10 + $0xf0] sm:$0xff]
        %v924 = vld [vmem:[#allocation10 + $0xf8] sm:$0xff]
        %v925 = vld [vmem:[#allocation10 + $0x100] sm:$0xff]
        %v926 = vld [vmem:[#allocation10 + $0x108] sm:$0xff]
        %v927 = vld [vmem:[#allocation10 + $0x110] sm:$0xff]
        %v928 = vld [vmem:[#allocation10 + $0x118] sm:$0xff]
        %v929 = vld [vmem:[#allocation10 + $0x120] sm:$0xff]
        %v930 = vld [vmem:[#allocation10 + $0x128] sm:$0xff]
        %v931 = vld [vmem:[#allocation10 + $0x130] sm:$0xff]
        %v932 = vld [vmem:[#allocation10 + $0x138] sm:$0xff]
        %v933 = vld [vmem:[#allocation10 + $0x140] sm:$0xff]
        %v934 = vld [vmem:[#allocation10 + $0x148] sm:$0xff]
        %v935 = vld [vmem:[#allocation10 + $0x150] sm:$0xff]
        %v936 = vld [vmem:[#allocation10 + $0x158] sm:$0xff]
        %v937 = vld [vmem:[#allocation10 + $0x160] sm:$0xff]
        %v938 = vld [vmem:[#allocation10 + $0x168] sm:$0xff]
        %v939 = vld [vmem:[#allocation10 + $0x170] sm:$0xff]
        %v940 = vld [vmem:[#allocation10 + $0x178] sm:$0xff]
        %v941 = vmul.f32 %v885, %v525
        %v942 = vmul.f32 %v886, %v526
        %v943 = vmul.f32 %v887, %v527
        %v944 = vmul.f32 %v888, %v528
        %v945 = vmul.f32 %v889, %v529
        %v946 = vmul.f32 %v890, %v530
        %v947 = vmul.f32 %v891, %v531
        %v948 = vmul.f32 %v892, %v532
        %v949 = vrot.slane %v941, 7
        %v950 = vrot.slane %v942, 7
        %v951 = vrot.slane %v943, 7
        %v952 = vrot.slane %v944, 7
        %v953 = vrot.slane %v945, 7
        %v954 = vrot.slane %v946, 7
        %v955 = vrot.slane %v947, 7
        %v956 = vrot.slane %v948, 7
        %v957 = vsel %vm627, %v955, %v956
        %v958 = vsel %vm627, %v954, %v955
        %v959 = vsel %vm627, %v953, %v954
        %v960 = vsel %vm627, %v952, %v953
        %v961 = vsel %vm627, %v951, %v952
        %v962 = vsel %vm627, %v950, %v951
        %v963 = vsel %vm627, %v949, %v950
        %v964 = vsel %vm627, %v956, %v949
        %v965 = vrot.slane %v941, 1
        %v966 = vrot.slane %v942, 1
        %v967 = vrot.slane %v943, 1
        %v968 = vrot.slane %v944, 1
        %v969 = vrot.slane %v945, 1
        %v970 = vrot.slane %v946, 1
        %v971 = vrot.slane %v947, 1
        %v972 = vrot.slane %v948, 1
        %v973 = vsel %vm644, %v971, %v972
        %v974 = vsel %vm644, %v970, %v971
        %v975 = vsel %vm644, %v969, %v970
        %v976 = vsel %vm644, %v968, %v969
        %v977 = vsel %vm644, %v967, %v968
        %v978 = vsel %vm644, %v966, %v967
        %v979 = vsel %vm644, %v965, %v966
        %v980 = vsel %vm644, %v972, %v965
        %v982 = vlaneseq
        %v983 = vshrl.u32 %v982, 7
        %v984 = vsub.s32 0, %v983
        %v985 = vrot.slane %v536, %v984
        %987 = vmatprep.subr.mxu0 0.0
        %988 = vmatpush1.msra.mxu0 %v893
        %989 = vmatprep.subr.mxu0 0.0
        %990 = vmatpush1.msra.mxu0 %v894
        %991 = vmatprep.subr.mxu0 0.0
        %992 = vmatpush1.msra.mxu0 %v895
        %993 = vmatprep.subr.mxu0 0.0
        %994 = vmatpush1.msra.mxu0 %v896
        %995 = vmatprep.subr.mxu0 0.0
        %996 = vmatpush1.msra.mxu0 %v897
        %997 = vmatprep.subr.mxu0 0.0
        %998 = vmatpush1.msra.mxu0 %v898
        %999 = vmatprep.subr.mxu0 0.0
        %1000 = vmatpush1.msra.mxu0 %v899
        %1001 = vmatprep.subr.mxu0 0.0
        %1002 = vmatpush1.msra.mxu0 %v900
        %1003 = vmatprep.subr.mxu0 0.0
        %1004 = vmatpush1.msra.mxu0 %v901
        %1005 = vmatprep.subr.mxu0 0.0
        %1006 = vmatpush1.msra.mxu0 %v902
        %1007 = vmatprep.subr.mxu0 0.0
        %1008 = vmatpush1.msra.mxu0 %v903
        %1009 = vmatprep.subr.mxu0 0.0
        %1010 = vmatpush1.msra.mxu0 %v904
        %1011 = vmatprep.subr.mxu0 0.0
        %1012 = vmatpush1.msra.mxu0 %v905
        %1013 = vmatprep.subr.mxu0 0.0
        %1014 = vmatpush1.msra.mxu0 %v906
        %1015 = vmatprep.subr.mxu0 0.0
        %1016 = vmatpush1.msra.mxu0 %v907
        %1017 = vmatprep.subr.mxu0 0.0
        %1018 = vmatpush1.msra.mxu0 %v908
        %1019 = vmatprep.subr.mxu0 0.0
        %1020 = vmatpush1.msra.mxu0 %v909
        %1021 = vmatprep.subr.mxu0 0.0
        %1022 = vmatpush1.msra.mxu0 %v910
        %1023 = vmatprep.subr.mxu0 0.0
        %1024 = vmatpush1.msra.mxu0 %v911
        %1025 = vmatprep.subr.mxu0 0.0
        %1026 = vmatpush1.msra.mxu0 %v912
        %1027 = vmatprep.subr.mxu0 0.0
        %1028 = vmatpush1.msra.mxu0 %v913
        %1029 = vmatprep.subr.mxu0 0.0
        %1030 = vmatpush1.msra.mxu0 %v914
        %1031 = vmatprep.subr.mxu0 0.0
        %1032 = vmatpush1.msra.mxu0 %v915
        %1033 = vmatprep.subr.mxu0 0.0
        %1034 = vmatpush1.msra.mxu0 %v916
        %1035 = vmatprep.subr.mxu0 0.0
        %1036 = vmatpush1.msra.mxu0 %v917
        %1037 = vmatprep.subr.mxu0 0.0
        %1038 = vmatpush1.msra.mxu0 %v918
        %1039 = vmatprep.subr.mxu0 0.0
        %1040 = vmatpush1.msra.mxu0 %v919
        %1041 = vmatprep.subr.mxu0 0.0
        %1042 = vmatpush1.msra.mxu0 %v920
        %1043 = vmatprep.subr.mxu0 0.0
        %1044 = vmatpush1.msra.mxu0 %v921
        %1045 = vmatprep.subr.mxu0 0.0
        %1046 = vmatpush1.msra.mxu0 %v922
        %1047 = vmatprep.subr.mxu0 0.0
        %1048 = vmatpush1.msra.mxu0 %v923
        %1049 = vmatprep.subr.mxu0 0.0
        %1050 = vmatpush1.msra.mxu0 %v924
        %1051 = vmatprep.mubr.f32.mxu0 %v941
        %1052 = vmatmul.mubr.f32.gmra.mrb[0].mxu0 %v964
        %v1053 = vpop.f32.mrb[0].mxu0
        %v1054 = vadd.f32 %v985, %v1053
        %v1055 = vpop.f32.mrb[0].mxu0
        %1056 = vmatprep.mubr.f32.mxu0 %v942
        %1057 = vmatmul.mubr.f32.gmra.mrb[0].mxu0 %v963
        %v1058 = vpop.f32.mrb[0].mxu0
        %v1059 = vadd.f32 %v985, %v1058
        %v1060 = vpop.f32.mrb[0].mxu0
        %1061 = vmatprep.mubr.f32.mxu0 %v943
        %1062 = vmatmul.mubr.f32.gmra.mrb[0].mxu0 %v962
        %v1063 = vpop.f32.mrb[0].mxu0
        %v1064 = vadd.f32 %v985, %v1063
        %v1065 = vpop.f32.mrb[0].mxu0
        %1066 = vmatprep.mubr.f32.mxu0 %v944
        %1067 = vmatmul.mubr.f32.gmra.mrb[0].mxu0 %v961
        %v1068 = vpop.f32.mrb[0].mxu0
        %v1069 = vadd.f32 %v985, %v1068
        %v1070 = vpop.f32.mrb[0].mxu0
        %1071 = vmatprep.mubr.f32.mxu0 %v945
        %1072 = vmatmul.mubr.f32.gmra.mrb[0].mxu0 %v960
        %v1073 = vpop.f32.mrb[0].mxu0
        %v1074 = vadd.f32 %v985, %v1073
        %v1075 = vpop.f32.mrb[0].mxu0
        %1076 = vmatprep.mubr.f32.mxu0 %v946
        %1077 = vmatmul.mubr.f32.gmra.mrb[0].mxu0 %v959
        %v1078 = vpop.f32.mrb[0].mxu0
        %v1079 = vadd.f32 %v985, %v1078
        %v1080 = vpop.f32.mrb[0].mxu0
        %1081 = vmatprep.mubr.f32.mxu0 %v947
        %1082 = vmatmul.mubr.f32.gmra.mrb[0].mxu0 %v958
        %v1083 = vpop.f32.mrb[0].mxu0
        %v1084 = vadd.f32 %v985, %v1083
        %v1085 = vpop.f32.mrb[0].mxu0
        %1086 = vmatprep.mubr.f32.mxu0 %v948
        %1087 = vmatmul.mubr.f32.gmra.mrb[0].mxu0 %v957
        %v1088 = vpop.f32.mrb[0].mxu0
        %v1089 = vadd.f32 %v985, %v1088
        %v1090 = vpop.f32.mrb[0].mxu0
        %1091 = vdwg.mxu0
        %1092 = vmatprep.subr.mxu0 0.0
        %1093 = vmatpush1.msra.mxu0 %v925
        %1094 = vmatprep.subr.mxu0 0.0
        %1095 = vmatpush1.msra.mxu0 %v926
        %1096 = vmatprep.subr.mxu0 0.0
        %1097 = vmatpush1.msra.mxu0 %v927
        %1098 = vmatprep.subr.mxu0 0.0
        %1099 = vmatpush1.msra.mxu0 %v928
        %1100 = vmatprep.subr.mxu0 0.0
        %1101 = vmatpush1.msra.mxu0 %v929
        %1102 = vmatprep.subr.mxu0 0.0
        %1103 = vmatpush1.msra.mxu0 %v930
        %1104 = vmatprep.subr.mxu0 0.0
        %1105 = vmatpush1.msra.mxu0 %v931
        %1106 = vmatprep.subr.mxu0 0.0
        %1107 = vmatpush1.msra.mxu0 %v932
        %1108 = vmatprep.subr.mxu0 0.0
        %1109 = vmatpush1.msra.mxu0 %v933
        %1110 = vmatprep.subr.mxu0 0.0
        %1111 = vmatpush1.msra.mxu0 %v934
        %1112 = vmatprep.subr.mxu0 0.0
        %1113 = vmatpush1.msra.mxu0 %v935
        %1114 = vmatprep.subr.mxu0 0.0
        %1115 = vmatpush1.msra.mxu0 %v936
        %1116 = vmatprep.subr.mxu0 0.0
        %1117 = vmatpush1.msra.mxu0 %v937
        %1118 = vmatprep.subr.mxu0 0.0
        %1119 = vmatpush1.msra.mxu0 %v938
        %1120 = vmatprep.subr.mxu0 0.0
        %1121 = vmatpush1.msra.mxu0 %v939
        %1122 = vmatprep.subr.mxu0 0.0
        %1123 = vmatpush1.msra.mxu0 %v940
        %1124 = vmatprep.subr.mxu0 0.0
        %1125 = vmatpush1.msra.mxu0 0.0
        %1126 = vmatprep.subr.mxu0 0.0
        %1127 = vmatpush1.msra.mxu0 0.0
        %1128 = vmatprep.subr.mxu0 0.0
        %1129 = vmatpush1.msra.mxu0 0.0
        %1130 = vmatprep.subr.mxu0 0.0
        %1131 = vmatpush1.msra.mxu0 0.0
        %1132 = vmatprep.subr.mxu0 0.0
        %1133 = vmatpush1.msra.mxu0 0.0
        %1134 = vmatprep.subr.mxu0 0.0
        %1135 = vmatpush1.msra.mxu0 0.0
        %1136 = vmatprep.subr.mxu0 0.0
        %1137 = vmatpush1.msra.mxu0 0.0
        %1138 = vmatprep.subr.mxu0 0.0
        %1139 = vmatpush1.msra.mxu0 0.0
        %1140 = vmatprep.subr.mxu0 0.0
        %1141 = vmatpush1.msra.mxu0 0.0
        %1142 = vmatprep.subr.mxu0 0.0
        %1143 = vmatpush1.msra.mxu0 0.0
        %1144 = vmatprep.subr.mxu0 0.0
        %1145 = vmatpush1.msra.mxu0 0.0
        %1146 = vmatprep.subr.mxu0 0.0
        %1147 = vmatpush1.msra.mxu0 0.0
        %1148 = vmatprep.subr.mxu0 0.0
        %1149 = vmatpush1.msra.mxu0 0.0
        %1150 = vmatprep.subr.mxu0 0.0
        %1151 = vmatpush1.msra.mxu0 0.0
        %1152 = vmatprep.subr.mxu0 0.0
        %1153 = vmatpush1.msra.mxu0 0.0
        %1154 = vmatprep.subr.mxu0 0.0
        %1155 = vmatpush1.msra.mxu0 0.0
        %1156 = vmatprep.mubr.f32.mxu0 0.0
        %1157 = vmatmul.mubr.f32.gmra.mrb[0].mxu0 %v979
        %v1158 = vpop.f32.mrb[0].mxu0
        %v1159 = vadd.f32 %v1054, %v1158
        %v1160 = vpop.f32.mrb[0].mxu0
        %1161 = vmatprep.mubr.f32.mxu0 0.0
        %1162 = vmatmul.mubr.f32.gmra.mrb[0].mxu0 %v978
        %v1163 = vpop.f32.mrb[0].mxu0
        %v1164 = vadd.f32 %v1059, %v1163
        %v1165 = vpop.f32.mrb[0].mxu0
        %1166 = vmatprep.mubr.f32.mxu0 0.0
        %1167 = vmatmul.mubr.f32.gmra.mrb[0].mxu0 %v977
        %v1168 = vpop.f32.mrb[0].mxu0
        %v1169 = vadd.f32 %v1064, %v1168
        %v1170 = vpop.f32.mrb[0].mxu0
        %1171 = vmatprep.mubr.f32.mxu0 0.0
        %1172 = vmatmul.mubr.f32.gmra.mrb[0].mxu0 %v976
        %v1173 = vpop.f32.mrb[0].mxu0
        %v1174 = vadd.f32 %v1069, %v1173
        %v1175 = vpop.f32.mrb[0].mxu0
        %1176 = vmatprep.mubr.f32.mxu0 0.0
        %1177 = vmatmul.mubr.f32.gmra.mrb[0].mxu0 %v975
        %v1178 = vpop.f32.mrb[0].mxu0
        %v1179 = vadd.f32 %v1074, %v1178
        %v1180 = vpop.f32.mrb[0].mxu0
        %1181 = vmatprep.mubr.f32.mxu0 0.0
        %1182 = vmatmul.mubr.f32.gmra.mrb[0].mxu0 %v974
        %v1183 = vpop.f32.mrb[0].mxu0
        %v1184 = vadd.f32 %v1079, %v1183
        %v1185 = vpop.f32.mrb[0].mxu0
        %1186 = vmatprep.mubr.f32.mxu0 0.0
        %1187 = vmatmul.mubr.f32.gmra.mrb[0].mxu0 %v973
        %v1188 = vpop.f32.mrb[0].mxu0
        %v1189 = vadd.f32 %v1084, %v1188
        %v1190 = vpop.f32.mrb[0].mxu0
        %1191 = vmatprep.mubr.f32.mxu0 0.0
        %1192 = vmatmul.mubr.f32.gmra.mrb[0].mxu0 %v980
        %v1193 = vpop.f32.mrb[0].mxu0
        %v1194 = vadd.f32 %v1089, %v1193
        %v1195 = vpop.f32.mrb[0].mxu0
        %1196 = vdwg.mxu0
        %v1197 = vadd.f32 %v1159, %v465
        %v1198 = vadd.f32 %v1164, %v466
        %v1199 = vadd.f32 %v1169, %v467
        %v1200 = vadd.f32 %v1174, %v468
        %v1201 = vadd.f32 %v1179, %v469
        %v1202 = vadd.f32 %v1184, %v470
        %v1203 = vadd.f32 %v1189, %v471
        %v1204 = vadd.f32 %v1194, %v472
        %vm1205 = vcmp.gt.f32.partialorder %v1197, 0.0
        %vm1206 = vcmp.gt.f32.partialorder %v1198, 0.0
        %vm1207 = vcmp.gt.f32.partialorder %v1199, 0.0
        %vm1208 = vcmp.gt.f32.partialorder %v1200, 0.0
        %vm1209 = vcmp.gt.f32.partialorder %v1201, 0.0
        %vm1210 = vcmp.gt.f32.partialorder %v1202, 0.0
        %vm1211 = vcmp.gt.f32.partialorder %v1203, 0.0
        %vm1212 = vcmp.gt.f32.partialorder %v1204, 0.0
        %v1213 = vmul.f32 %v1197, 0.1
        %v1214 = vmul.f32 %v1198, 0.1
        %v1215 = vmul.f32 %v1199, 0.1
        %v1216 = vmul.f32 %v1200, 0.1
        %v1217 = vmul.f32 %v1201, 0.1
        %v1218 = vmul.f32 %v1202, 0.1
        %v1219 = vmul.f32 %v1203, 0.1
        %v1220 = vmul.f32 %v1204, 0.1
        %v1221 = vsel %vm1205, %v1197, %v1213
        %v1222 = vsel %vm1206, %v1198, %v1214
        %v1223 = vsel %vm1207, %v1199, %v1215
        %v1224 = vsel %vm1208, %v1200, %v1216
        %v1225 = vsel %vm1209, %v1201, %v1217
        %v1226 = vsel %vm1210, %v1202, %v1218
        %v1227 = vsel %vm1211, %v1203, %v1219
        %v1228 = vsel %vm1212, %v1204, %v1220
        %s1229 = scalar_lea.vmem [#allocation8], 384
        %v1230 = vld [vmem:[%s1229] sm:$0xff]
        %v1231 = vld [vmem:[%s1229 + $0x8] sm:$0xff]
        %v1232 = vld [vmem:[%s1229 + $0x10] sm:$0xff]
        %v1233 = vld [vmem:[%s1229 + $0x18] sm:$0xff]
        %v1234 = vld [vmem:[%s1229 + $0x20] sm:$0xff]
        %v1235 = vld [vmem:[%s1229 + $0x28] sm:$0xff]
        %v1236 = vld [vmem:[%s1229 + $0x30] sm:$0xff]
        %v1237 = vld [vmem:[%s1229 + $0x38] sm:$0xff]
        %v1238 = vld [vmem:[%s1229 + $0x40] sm:$0xff]
        %v1239 = vld [vmem:[%s1229 + $0x48] sm:$0xff]
        %v1240 = vld [vmem:[%s1229 + $0x50] sm:$0xff]
        %v1241 = vld [vmem:[%s1229 + $0x58] sm:$0xff]
        %v1242 = vld [vmem:[%s1229 + $0x60] sm:$0xff]
        %v1243 = vld [vmem:[%s1229 + $0x68] sm:$0xff]
        %v1244 = vld [vmem:[%s1229 + $0x70] sm:$0xff]
        %v1245 = vld [vmem:[%s1229 + $0x78] sm:$0xff]
        %v1246 = vld [vmem:[%s1229 + $0x80] sm:$0xff]
        %v1247 = vld [vmem:[%s1229 + $0x88] sm:$0xff]
        %v1248 = vld [vmem:[%s1229 + $0x90] sm:$0xff]
        %v1249 = vld [vmem:[%s1229 + $0x98] sm:$0xff]
        %v1250 = vld [vmem:[%s1229 + $0xa0] sm:$0xff]
        %v1251 = vld [vmem:[%s1229 + $0xa8] sm:$0xff]
        %v1252 = vld [vmem:[%s1229 + $0xb0] sm:$0xff]
        %v1253 = vld [vmem:[%s1229 + $0xb8] sm:$0xff]
        %v1254 = vld [vmem:[%s1229 + $0xc0] sm:$0xff]
        %v1255 = vld [vmem:[%s1229 + $0xc8] sm:$0xff]
        %v1256 = vld [vmem:[%s1229 + $0xd0] sm:$0xff]
        %v1257 = vld [vmem:[%s1229 + $0xd8] sm:$0xff]
        %v1258 = vld [vmem:[%s1229 + $0xe0] sm:$0xff]
        %v1259 = vld [vmem:[%s1229 + $0xe8] sm:$0xff]
        %v1260 = vld [vmem:[%s1229 + $0xf0] sm:$0xff]
        %v1261 = vld [vmem:[%s1229 + $0xf8] sm:$0xff]
        %v1262 = vld [vmem:[%s1229 + $0x100] sm:$0xff]
        %v1263 = vld [vmem:[%s1229 + $0x108] sm:$0xff]
        %v1264 = vld [vmem:[%s1229 + $0x110] sm:$0xff]
        %v1265 = vld [vmem:[%s1229 + $0x118] sm:$0xff]
        %v1266 = vld [vmem:[%s1229 + $0x120] sm:$0xff]
        %v1267 = vld [vmem:[%s1229 + $0x128] sm:$0xff]
        %v1268 = vld [vmem:[%s1229 + $0x130] sm:$0xff]
        %v1269 = vld [vmem:[%s1229 + $0x138] sm:$0xff]
        %v1270 = vld [vmem:[%s1229 + $0x140] sm:$0xff]
        %v1271 = vld [vmem:[%s1229 + $0x148] sm:$0xff]
        %v1272 = vld [vmem:[%s1229 + $0x150] sm:$0xff]
        %v1273 = vld [vmem:[%s1229 + $0x158] sm:$0xff]
        %v1274 = vld [vmem:[%s1229 + $0x160] sm:$0xff]
        %v1275 = vld [vmem:[%s1229 + $0x168] sm:$0xff]
        %v1276 = vld [vmem:[%s1229 + $0x170] sm:$0xff]
        %v1277 = vld [vmem:[%s1229 + $0x178] sm:$0xff]
        %v1278 = vmul.f32 %v1221, %v525
        %v1279 = vmul.f32 %v1222, %v526
        %v1280 = vmul.f32 %v1223, %v527
        %v1281 = vmul.f32 %v1224, %v528
        %v1282 = vmul.f32 %v1225, %v529
        %v1283 = vmul.f32 %v1226, %v530
        %v1284 = vmul.f32 %v1227, %v531
        %v1285 = vmul.f32 %v1228, %v532
        %v1286 = vrot.slane %v1278, 5
        %v1287 = vrot.slane %v1279, 5
        %v1288 = vrot.slane %v1280, 5
        %v1289 = vrot.slane %v1281, 5
        %v1290 = vrot.slane %v1282, 5
        %v1291 = vrot.slane %v1283, 5
        %v1292 = vrot.slane %v1284, 5
        %v1293 = vrot.slane %v1285, 5
        %vm1294 = vcmp.lt.s32.totalorder %v474, 3
        %v1295 = vsel %vm1294, %v1292, %v1293
        %v1296 = vsel %vm1294, %v1291, %v1292
        %v1297 = vsel %vm1294, %v1290, %v1291
        %v1298 = vsel %vm1294, %v1289, %v1290
        %v1299 = vsel %vm1294, %v1288, %v1289
        %v1300 = vsel %vm1294, %v1287, %v1288
        %v1301 = vsel %vm1294, %v1286, %v1287
        %v1302 = vsel %vm1294, %v1293, %v1286
        %v1303 = vrot.slane %v1278, 3
        %v1304 = vrot.slane %v1279, 3
        %v1305 = vrot.slane %v1280, 3
        %v1306 = vrot.slane %v1281, 3
        %v1307 = vrot.slane %v1282, 3
        %v1308 = vrot.slane %v1283, 3
        %v1309 = vrot.slane %v1284, 3
        %v1310 = vrot.slane %v1285, 3
        %vm1311 = vcmp.lt.s32.totalorder %v474, 5
        %v1312 = vsel %vm1311, %v1309, %v1310
        %v1313 = vsel %vm1311, %v1308, %v1309
        %v1314 = vsel %vm1311, %v1307, %v1308
        %v1315 = vsel %vm1311, %v1306, %v1307
        %v1316 = vsel %vm1311, %v1305, %v1306
        %v1317 = vsel %vm1311, %v1304, %v1305
        %v1318 = vsel %vm1311, %v1303, %v1304
        %v1319 = vsel %vm1311, %v1310, %v1303
        %v1321 = vlaneseq
        %v1322 = vshrl.u32 %v1321, 7
        %v1323 = vsub.s32 0, %v1322
        %v1324 = vrot.slane %v534, %v1323
        %1326 = vmatprep.subr.mxu0 0.0
        %1327 = vmatpush1.msra.mxu0 %v1230
        %1328 = vmatprep.subr.mxu0 0.0
        %1329 = vmatpush1.msra.mxu0 %v1231
        %1330 = vmatprep.subr.mxu0 0.0
        %1331 = vmatpush1.msra.mxu0 %v1232
        %1332 = vmatprep.subr.mxu0 0.0
        %1333 = vmatpush1.msra.mxu0 %v1233
        %1334 = vmatprep.subr.mxu0 0.0
        %1335 = vmatpush1.msra.mxu0 %v1234
        %1336 = vmatprep.subr.mxu0 0.0
        %1337 = vmatpush1.msra.mxu0 %v1235
        %1338 = vmatprep.subr.mxu0 0.0
        %1339 = vmatpush1.msra.mxu0 %v1236
        %1340 = vmatprep.subr.mxu0 0.0
        %1341 = vmatpush1.msra.mxu0 %v1237
        %1342 = vmatprep.subr.mxu0 0.0
        %1343 = vmatpush1.msra.mxu0 %v1238
        %1344 = vmatprep.subr.mxu0 0.0
        %1345 = vmatpush1.msra.mxu0 %v1239
        %1346 = vmatprep.subr.mxu0 0.0
        %1347 = vmatpush1.msra.mxu0 %v1240
        %1348 = vmatprep.subr.mxu0 0.0
        %1349 = vmatpush1.msra.mxu0 %v1241
        %1350 = vmatprep.subr.mxu0 0.0
        %1351 = vmatpush1.msra.mxu0 %v1242
        %1352 = vmatprep.subr.mxu0 0.0
        %1353 = vmatpush1.msra.mxu0 %v1243
        %1354 = vmatprep.subr.mxu0 0.0
        %1355 = vmatpush1.msra.mxu0 %v1244
        %1356 = vmatprep.subr.mxu0 0.0
        %1357 = vmatpush1.msra.mxu0 %v1245
        %1358 = vmatprep.subr.mxu0 0.0
        %1359 = vmatpush1.msra.mxu0 %v1246
        %1360 = vmatprep.subr.mxu0 0.0
        %1361 = vmatpush1.msra.mxu0 %v1247
        %1362 = vmatprep.subr.mxu0 0.0
        %1363 = vmatpush1.msra.mxu0 %v1248
        %1364 = vmatprep.subr.mxu0 0.0
        %1365 = vmatpush1.msra.mxu0 %v1249
        %1366 = vmatprep.subr.mxu0 0.0
        %1367 = vmatpush1.msra.mxu0 %v1250
        %1368 = vmatprep.subr.mxu0 0.0
        %1369 = vmatpush1.msra.mxu0 %v1251
        %1370 = vmatprep.subr.mxu0 0.0
        %1371 = vmatpush1.msra.mxu0 %v1252
        %1372 = vmatprep.subr.mxu0 0.0
        %1373 = vmatpush1.msra.mxu0 %v1253
        %1374 = vmatprep.subr.mxu0 0.0
        %1375 = vmatpush1.msra.mxu0 %v1254
        %1376 = vmatprep.subr.mxu0 0.0
        %1377 = vmatpush1.msra.mxu0 %v1255
        %1378 = vmatprep.subr.mxu0 0.0
        %1379 = vmatpush1.msra.mxu0 %v1256
        %1380 = vmatprep.subr.mxu0 0.0
        %1381 = vmatpush1.msra.mxu0 %v1257
        %1382 = vmatprep.subr.mxu0 0.0
        %1383 = vmatpush1.msra.mxu0 %v1258
        %1384 = vmatprep.subr.mxu0 0.0
        %1385 = vmatpush1.msra.mxu0 %v1259
        %1386 = vmatprep.subr.mxu0 0.0
        %1387 = vmatpush1.msra.mxu0 %v1260
        %1388 = vmatprep.subr.mxu0 0.0
        %1389 = vmatpush1.msra.mxu0 %v1261
        %1390 = vmatprep.mubr.f32.mxu0 %v1278
        %1391 = vmatmul.mubr.f32.gmra.mrb[0].mxu0 %v1302
        %v1392 = vpop.f32.mrb[0].mxu0
        %v1393 = vadd.f32 %v1324, %v1392
        %v1394 = vpop.f32.mrb[0].mxu0
        %1395 = vmatprep.mubr.f32.mxu0 %v1279
        %1396 = vmatmul.mubr.f32.gmra.mrb[0].mxu0 %v1301
        %v1397 = vpop.f32.mrb[0].mxu0
        %v1398 = vadd.f32 %v1324, %v1397
        %v1399 = vpop.f32.mrb[0].mxu0
        %1400 = vmatprep.mubr.f32.mxu0 %v1280
        %1401 = vmatmul.mubr.f32.gmra.mrb[0].mxu0 %v1300
        %v1402 = vpop.f32.mrb[0].mxu0
        %v1403 = vadd.f32 %v1324, %v1402
        %v1404 = vpop.f32.mrb[0].mxu0
        %1405 = vmatprep.mubr.f32.mxu0 %v1281
        %1406 = vmatmul.mubr.f32.gmra.mrb[0].mxu0 %v1299
        %v1407 = vpop.f32.mrb[0].mxu0
        %v1408 = vadd.f32 %v1324, %v1407
        %v1409 = vpop.f32.mrb[0].mxu0
        %1410 = vmatprep.mubr.f32.mxu0 %v1282
        %1411 = vmatmul.mubr.f32.gmra.mrb[0].mxu0 %v1298
        %v1412 = vpop.f32.mrb[0].mxu0
        %v1413 = vadd.f32 %v1324, %v1412
        %v1414 = vpop.f32.mrb[0].mxu0
        %1415 = vmatprep.mubr.f32.mxu0 %v1283
        %1416 = vmatmul.mubr.f32.gmra.mrb[0].mxu0 %v1297
        %v1417 = vpop.f32.mrb[0].mxu0
        %v1418 = vadd.f32 %v1324, %v1417
        %v1419 = vpop.f32.mrb[0].mxu0
        %1420 = vmatprep.mubr.f32.mxu0 %v1284
        %1421 = vmatmul.mubr.f32.gmra.mrb[0].mxu0 %v1296
        %v1422 = vpop.f32.mrb[0].mxu0
        %v1423 = vadd.f32 %v1324, %v1422
        %v1424 = vpop.f32.mrb[0].mxu0
        %1425 = vmatprep.mubr.f32.mxu0 %v1285
        %1426 = vmatmul.mubr.f32.gmra.mrb[0].mxu0 %v1295
        %v1427 = vpop.f32.mrb[0].mxu0
        %v1428 = vadd.f32 %v1324, %v1427
        %v1429 = vpop.f32.mrb[0].mxu0
        %1430 = vdwg.mxu0
        %1431 = vmatprep.subr.mxu0 0.0
        %1432 = vmatpush1.msra.mxu0 %v1262
        %1433 = vmatprep.subr.mxu0 0.0
        %1434 = vmatpush1.msra.mxu0 %v1263
        %1435 = vmatprep.subr.mxu0 0.0
        %1436 = vmatpush1.msra.mxu0 %v1264
        %1437 = vmatprep.subr.mxu0 0.0
        %1438 = vmatpush1.msra.mxu0 %v1265
        %1439 = vmatprep.subr.mxu0 0.0
        %1440 = vmatpush1.msra.mxu0 %v1266
        %1441 = vmatprep.subr.mxu0 0.0
        %1442 = vmatpush1.msra.mxu0 %v1267
        %1443 = vmatprep.subr.mxu0 0.0
        %1444 = vmatpush1.msra.mxu0 %v1268
        %1445 = vmatprep.subr.mxu0 0.0
        %1446 = vmatpush1.msra.mxu0 %v1269
        %1447 = vmatprep.subr.mxu0 0.0
        %1448 = vmatpush1.msra.mxu0 %v1270
        %1449 = vmatprep.subr.mxu0 0.0
        %1450 = vmatpush1.msra.mxu0 %v1271
        %1451 = vmatprep.subr.mxu0 0.0
        %1452 = vmatpush1.msra.mxu0 %v1272
        %1453 = vmatprep.subr.mxu0 0.0
        %1454 = vmatpush1.msra.mxu0 %v1273
        %1455 = vmatprep.subr.mxu0 0.0
        %1456 = vmatpush1.msra.mxu0 %v1274
        %1457 = vmatprep.subr.mxu0 0.0
        %1458 = vmatpush1.msra.mxu0 %v1275
        %1459 = vmatprep.subr.mxu0 0.0
        %1460 = vmatpush1.msra.mxu0 %v1276
        %1461 = vmatprep.subr.mxu0 0.0
        %1462 = vmatpush1.msra.mxu0 %v1277
        %1463 = vmatprep.subr.mxu0 0.0
        %1464 = vmatpush1.msra.mxu0 0.0
        %1465 = vmatprep.subr.mxu0 0.0
        %1466 = vmatpush1.msra.mxu0 0.0
        %1467 = vmatprep.subr.mxu0 0.0
        %1468 = vmatpush1.msra.mxu0 0.0
        %1469 = vmatprep.subr.mxu0 0.0
        %1470 = vmatpush1.msra.mxu0 0.0
        %1471 = vmatprep.subr.mxu0 0.0
        %1472 = vmatpush1.msra.mxu0 0.0
        %1473 = vmatprep.subr.mxu0 0.0
        %1474 = vmatpush1.msra.mxu0 0.0
        %1475 = vmatprep.subr.mxu0 0.0
        %1476 = vmatpush1.msra.mxu0 0.0
        %1477 = vmatprep.subr.mxu0 0.0
        %1478 = vmatpush1.msra.mxu0 0.0
        %1479 = vmatprep.subr.mxu0 0.0
        %1480 = vmatpush1.msra.mxu0 0.0
        %1481 = vmatprep.subr.mxu0 0.0
        %1482 = vmatpush1.msra.mxu0 0.0
        %1483 = vmatprep.subr.mxu0 0.0
        %1484 = vmatpush1.msra.mxu0 0.0
        %1485 = vmatprep.subr.mxu0 0.0
        %1486 = vmatpush1.msra.mxu0 0.0
        %1487 = vmatprep.subr.mxu0 0.0
        %1488 = vmatpush1.msra.mxu0 0.0
        %1489 = vmatprep.subr.mxu0 0.0
        %1490 = vmatpush1.msra.mxu0 0.0
        %1491 = vmatprep.subr.mxu0 0.0
        %1492 = vmatpush1.msra.mxu0 0.0
        %1493 = vmatprep.subr.mxu0 0.0
        %1494 = vmatpush1.msra.mxu0 0.0
        %1495 = vmatprep.mubr.f32.mxu0 0.0
        %1496 = vmatmul.mubr.f32.gmra.mrb[0].mxu0 %v1318
        %v1497 = vpop.f32.mrb[0].mxu0
        %v1498 = vadd.f32 %v1393, %v1497
        %v1499 = vpop.f32.mrb[0].mxu0
        %1500 = vmatprep.mubr.f32.mxu0 0.0
        %1501 = vmatmul.mubr.f32.gmra.mrb[0].mxu0 %v1317
        %v1502 = vpop.f32.mrb[0].mxu0
        %v1503 = vadd.f32 %v1398, %v1502
        %v1504 = vpop.f32.mrb[0].mxu0
        %1505 = vmatprep.mubr.f32.mxu0 0.0
        %1506 = vmatmul.mubr.f32.gmra.mrb[0].mxu0 %v1316
        %v1507 = vpop.f32.mrb[0].mxu0
        %v1508 = vadd.f32 %v1403, %v1507
        %v1509 = vpop.f32.mrb[0].mxu0
        %1510 = vmatprep.mubr.f32.mxu0 0.0
        %1511 = vmatmul.mubr.f32.gmra.mrb[0].mxu0 %v1315
        %v1512 = vpop.f32.mrb[0].mxu0
        %v1513 = vadd.f32 %v1408, %v1512
        %v1514 = vpop.f32.mrb[0].mxu0
        %1515 = vmatprep.mubr.f32.mxu0 0.0
        %1516 = vmatmul.mubr.f32.gmra.mrb[0].mxu0 %v1314
        %v1517 = vpop.f32.mrb[0].mxu0
        %v1518 = vadd.f32 %v1413, %v1517
        %v1519 = vpop.f32.mrb[0].mxu0
        %1520 = vmatprep.mubr.f32.mxu0 0.0
        %1521 = vmatmul.mubr.f32.gmra.mrb[0].mxu0 %v1313
        %v1522 = vpop.f32.mrb[0].mxu0
        %v1523 = vadd.f32 %v1418, %v1522
        %v1524 = vpop.f32.mrb[0].mxu0
        %1525 = vmatprep.mubr.f32.mxu0 0.0
        %1526 = vmatmul.mubr.f32.gmra.mrb[0].mxu0 %v1312
        %v1527 = vpop.f32.mrb[0].mxu0
        %v1528 = vadd.f32 %v1423, %v1527
        %v1529 = vpop.f32.mrb[0].mxu0
        %1530 = vmatprep.mubr.f32.mxu0 0.0
        %1531 = vmatmul.mubr.f32.gmra.mrb[0].mxu0 %v1319
        %v1532 = vpop.f32.mrb[0].mxu0
        %v1533 = vadd.f32 %v1428, %v1532
        %v1534 = vpop.f32.mrb[0].mxu0
        %1535 = vdwg.mxu0
        %vm1536 = vcmp.gt.f32.partialorder %v1498, 0.0
        %vm1537 = vcmp.gt.f32.partialorder %v1503, 0.0
        %vm1538 = vcmp.gt.f32.partialorder %v1508, 0.0
        %vm1539 = vcmp.gt.f32.partialorder %v1513, 0.0
        %vm1540 = vcmp.gt.f32.partialorder %v1518, 0.0
        %vm1541 = vcmp.gt.f32.partialorder %v1523, 0.0
        %vm1542 = vcmp.gt.f32.partialorder %v1528, 0.0
        %vm1543 = vcmp.gt.f32.partialorder %v1533, 0.0
        %v1544 = vmul.f32 %v1498, 0.1
        %v1545 = vmul.f32 %v1503, 0.1
        %v1546 = vmul.f32 %v1508, 0.1
        %v1547 = vmul.f32 %v1513, 0.1
        %v1548 = vmul.f32 %v1518, 0.1
        %v1549 = vmul.f32 %v1523, 0.1
        %v1550 = vmul.f32 %v1528, 0.1
        %v1551 = vmul.f32 %v1533, 0.1
        %v1552 = vsel %vm1536, %v1498, %v1544
        %v1553 = vsel %vm1537, %v1503, %v1545
        %v1554 = vsel %vm1538, %v1508, %v1546
        %v1555 = vsel %vm1539, %v1513, %v1547
        %v1556 = vsel %vm1540, %v1518, %v1548
        %v1557 = vsel %vm1541, %v1523, %v1549
        %v1558 = vsel %vm1542, %v1528, %v1550
        %v1559 = vsel %vm1543, %v1533, %v1551
        %s1560 = scalar_lea.vmem [#allocation10], 384
        %v1561 = vld [vmem:[%s1560] sm:$0xff]
        %v1562 = vld [vmem:[%s1560 + $0x8] sm:$0xff]
        %v1563 = vld [vmem:[%s1560 + $0x10] sm:$0xff]
        %v1564 = vld [vmem:[%s1560 + $0x18] sm:$0xff]
        %v1565 = vld [vmem:[%s1560 + $0x20] sm:$0xff]
        %v1566 = vld [vmem:[%s1560 + $0x28] sm:$0xff]
        %v1567 = vld [vmem:[%s1560 + $0x30] sm:$0xff]
        %v1568 = vld [vmem:[%s1560 + $0x38] sm:$0xff]
        %v1569 = vld [vmem:[%s1560 + $0x40] sm:$0xff]
        %v1570 = vld [vmem:[%s1560 + $0x48] sm:$0xff]
        %v1571 = vld [vmem:[%s1560 + $0x50] sm:$0xff]
        %v1572 = vld [vmem:[%s1560 + $0x58] sm:$0xff]
        %v1573 = vld [vmem:[%s1560 + $0x60] sm:$0xff]
        %v1574 = vld [vmem:[%s1560 + $0x68] sm:$0xff]
        %v1575 = vld [vmem:[%s1560 + $0x70] sm:$0xff]
        %v1576 = vld [vmem:[%s1560 + $0x78] sm:$0xff]
        %v1577 = vld [vmem:[%s1560 + $0x80] sm:$0xff]
        %v1578 = vld [vmem:[%s1560 + $0x88] sm:$0xff]
        %v1579 = vld [vmem:[%s1560 + $0x90] sm:$0xff]
        %v1580 = vld [vmem:[%s1560 + $0x98] sm:$0xff]
        %v1581 = vld [vmem:[%s1560 + $0xa0] sm:$0xff]
        %v1582 = vld [vmem:[%s1560 + $0xa8] sm:$0xff]
        %v1583 = vld [vmem:[%s1560 + $0xb0] sm:$0xff]
        %v1584 = vld [vmem:[%s1560 + $0xb8] sm:$0xff]
        %v1585 = vld [vmem:[%s1560 + $0xc0] sm:$0xff]
        %v1586 = vld [vmem:[%s1560 + $0xc8] sm:$0xff]
        %v1587 = vld [vmem:[%s1560 + $0xd0] sm:$0xff]
        %v1588 = vld [vmem:[%s1560 + $0xd8] sm:$0xff]
        %v1589 = vld [vmem:[%s1560 + $0xe0] sm:$0xff]
        %v1590 = vld [vmem:[%s1560 + $0xe8] sm:$0xff]
        %v1591 = vld [vmem:[%s1560 + $0xf0] sm:$0xff]
        %v1592 = vld [vmem:[%s1560 + $0xf8] sm:$0xff]
        %v1593 = vld [vmem:[%s1560 + $0x100] sm:$0xff]
        %v1594 = vld [vmem:[%s1560 + $0x108] sm:$0xff]
        %v1595 = vld [vmem:[%s1560 + $0x110] sm:$0xff]
        %v1596 = vld [vmem:[%s1560 + $0x118] sm:$0xff]
        %v1597 = vld [vmem:[%s1560 + $0x120] sm:$0xff]
        %v1598 = vld [vmem:[%s1560 + $0x128] sm:$0xff]
        %v1599 = vld [vmem:[%s1560 + $0x130] sm:$0xff]
        %v1600 = vld [vmem:[%s1560 + $0x138] sm:$0xff]
        %v1601 = vld [vmem:[%s1560 + $0x140] sm:$0xff]
        %v1602 = vld [vmem:[%s1560 + $0x148] sm:$0xff]
        %v1603 = vld [vmem:[%s1560 + $0x150] sm:$0xff]
        %v1604 = vld [vmem:[%s1560 + $0x158] sm:$0xff]
        %v1605 = vld [vmem:[%s1560 + $0x160] sm:$0xff]
        %v1606 = vld [vmem:[%s1560 + $0x168] sm:$0xff]
        %v1607 = vld [vmem:[%s1560 + $0x170] sm:$0xff]
        %v1608 = vld [vmem:[%s1560 + $0x178] sm:$0xff]
        %v1609 = vmul.f32 %v1552, %v525
        %v1610 = vmul.f32 %v1553, %v526
        %v1611 = vmul.f32 %v1554, %v527
        %v1612 = vmul.f32 %v1555, %v528
        %v1613 = vmul.f32 %v1556, %v529
        %v1614 = vmul.f32 %v1557, %v530
        %v1615 = vmul.f32 %v1558, %v531
        %v1616 = vmul.f32 %v1559, %v532
        %v1617 = vrot.slane %v1609, 7
        %v1618 = vrot.slane %v1610, 7
        %v1619 = vrot.slane %v1611, 7
        %v1620 = vrot.slane %v1612, 7
        %v1621 = vrot.slane %v1613, 7
        %v1622 = vrot.slane %v1614, 7
        %v1623 = vrot.slane %v1615, 7
        %v1624 = vrot.slane %v1616, 7
        %v1625 = vsel %vm627, %v1623, %v1624
        %v1626 = vsel %vm627, %v1622, %v1623
        %v1627 = vsel %vm627, %v1621, %v1622
        %v1628 = vsel %vm627, %v1620, %v1621
        %v1629 = vsel %vm627, %v1619, %v1620
        %v1630 = vsel %vm627, %v1618, %v1619
        %v1631 = vsel %vm627, %v1617, %v1618
        %v1632 = vsel %vm627, %v1624, %v1617
        %v1633 = vrot.slane %v1609, 1
        %v1634 = vrot.slane %v1610, 1
        %v1635 = vrot.slane %v1611, 1
        %v1636 = vrot.slane %v1612, 1
        %v1637 = vrot.slane %v1613, 1
        %v1638 = vrot.slane %v1614, 1
        %v1639 = vrot.slane %v1615, 1
        %v1640 = vrot.slane %v1616, 1
        %v1641 = vsel %vm644, %v1639, %v1640
        %v1642 = vsel %vm644, %v1638, %v1639
        %v1643 = vsel %vm644, %v1637, %v1638
        %v1644 = vsel %vm644, %v1636, %v1637
        %v1645 = vsel %vm644, %v1635, %v1636
        %v1646 = vsel %vm644, %v1634, %v1635
        %v1647 = vsel %vm644, %v1633, %v1634
        %v1648 = vsel %vm644, %v1640, %v1633
        %v1650 = vlaneseq
        %v1651 = vshrl.u32 %v1650, 7
        %v1652 = vsub.s32 0, %v1651
        %v1653 = vrot.slane %v537, %v1652
        %1655 = vmatprep.subr.mxu0 0.0
        %1656 = vmatpush1.msra.mxu0 %v1561
        %1657 = vmatprep.subr.mxu0 0.0
        %1658 = vmatpush1.msra.mxu0 %v1562
        %1659 = vmatprep.subr.mxu0 0.0
        %1660 = vmatpush1.msra.mxu0 %v1563
        %1661 = vmatprep.subr.mxu0 0.0
        %1662 = vmatpush1.msra.mxu0 %v1564
        %1663 = vmatprep.subr.mxu0 0.0
        %1664 = vmatpush1.msra.mxu0 %v1565
        %1665 = vmatprep.subr.mxu0 0.0
        %1666 = vmatpush1.msra.mxu0 %v1566
        %1667 = vmatprep.subr.mxu0 0.0
        %1668 = vmatpush1.msra.mxu0 %v1567
        %1669 = vmatprep.subr.mxu0 0.0
        %1670 = vmatpush1.msra.mxu0 %v1568
        %1671 = vmatprep.subr.mxu0 0.0
        %1672 = vmatpush1.msra.mxu0 %v1569
        %1673 = vmatprep.subr.mxu0 0.0
        %1674 = vmatpush1.msra.mxu0 %v1570
        %1675 = vmatprep.subr.mxu0 0.0
        %1676 = vmatpush1.msra.mxu0 %v1571
        %1677 = vmatprep.subr.mxu0 0.0
        %1678 = vmatpush1.msra.mxu0 %v1572
        %1679 = vmatprep.subr.mxu0 0.0
        %1680 = vmatpush1.msra.mxu0 %v1573
        %1681 = vmatprep.subr.mxu0 0.0
        %1682 = vmatpush1.msra.mxu0 %v1574
        %1683 = vmatprep.subr.mxu0 0.0
        %1684 = vmatpush1.msra.mxu0 %v1575
        %1685 = vmatprep.subr.mxu0 0.0
        %1686 = vmatpush1.msra.mxu0 %v1576
        %1687 = vmatprep.subr.mxu0 0.0
        %1688 = vmatpush1.msra.mxu0 %v1577
        %1689 = vmatprep.subr.mxu0 0.0
        %1690 = vmatpush1.msra.mxu0 %v1578
        %1691 = vmatprep.subr.mxu0 0.0
        %1692 = vmatpush1.msra.mxu0 %v1579
        %1693 = vmatprep.subr.mxu0 0.0
        %1694 = vmatpush1.msra.mxu0 %v1580
        %1695 = vmatprep.subr.mxu0 0.0
        %1696 = vmatpush1.msra.mxu0 %v1581
        %1697 = vmatprep.subr.mxu0 0.0
        %1698 = vmatpush1.msra.mxu0 %v1582
        %1699 = vmatprep.subr.mxu0 0.0
        %1700 = vmatpush1.msra.mxu0 %v1583
        %1701 = vmatprep.subr.mxu0 0.0
        %1702 = vmatpush1.msra.mxu0 %v1584
        %1703 = vmatprep.subr.mxu0 0.0
        %1704 = vmatpush1.msra.mxu0 %v1585
        %1705 = vmatprep.subr.mxu0 0.0
        %1706 = vmatpush1.msra.mxu0 %v1586
        %1707 = vmatprep.subr.mxu0 0.0
        %1708 = vmatpush1.msra.mxu0 %v1587
        %1709 = vmatprep.subr.mxu0 0.0
        %1710 = vmatpush1.msra.mxu0 %v1588
        %1711 = vmatprep.subr.mxu0 0.0
        %1712 = vmatpush1.msra.mxu0 %v1589
        %1713 = vmatprep.subr.mxu0 0.0
        %1714 = vmatpush1.msra.mxu0 %v1590
        %1715 = vmatprep.subr.mxu0 0.0
        %1716 = vmatpush1.msra.mxu0 %v1591
        %1717 = vmatprep.subr.mxu0 0.0
        %1718 = vmatpush1.msra.mxu0 %v1592
        %1719 = vmatprep.mubr.f32.mxu0 %v1609
        %1720 = vmatmul.mubr.f32.gmra.mrb[0].mxu0 %v1632
        %v1721 = vpop.f32.mrb[0].mxu0
        %v1722 = vadd.f32 %v1653, %v1721
        %v1723 = vpop.f32.mrb[0].mxu0
        %1724 = vmatprep.mubr.f32.mxu0 %v1610
        %1725 = vmatmul.mubr.f32.gmra.mrb[0].mxu0 %v1631
        %v1726 = vpop.f32.mrb[0].mxu0
        %v1727 = vadd.f32 %v1653, %v1726
        %v1728 = vpop.f32.mrb[0].mxu0
        %1729 = vmatprep.mubr.f32.mxu0 %v1611
        %1730 = vmatmul.mubr.f32.gmra.mrb[0].mxu0 %v1630
        %v1731 = vpop.f32.mrb[0].mxu0
        %v1732 = vadd.f32 %v1653, %v1731
        %v1733 = vpop.f32.mrb[0].mxu0
        %1734 = vmatprep.mubr.f32.mxu0 %v1612
        %1735 = vmatmul.mubr.f32.gmra.mrb[0].mxu0 %v1629
        %v1736 = vpop.f32.mrb[0].mxu0
        %v1737 = vadd.f32 %v1653, %v1736
        %v1738 = vpop.f32.mrb[0].mxu0
        %1739 = vmatprep.mubr.f32.mxu0 %v1613
        %1740 = vmatmul.mubr.f32.gmra.mrb[0].mxu0 %v1628
        %v1741 = vpop.f32.mrb[0].mxu0
        %v1742 = vadd.f32 %v1653, %v1741
        %v1743 = vpop.f32.mrb[0].mxu0
        %1744 = vmatprep.mubr.f32.mxu0 %v1614
        %1745 = vmatmul.mubr.f32.gmra.mrb[0].mxu0 %v1627
        %v1746 = vpop.f32.mrb[0].mxu0
        %v1747 = vadd.f32 %v1653, %v1746
        %v1748 = vpop.f32.mrb[0].mxu0
        %1749 = vmatprep.mubr.f32.mxu0 %v1615
        %1750 = vmatmul.mubr.f32.gmra.mrb[0].mxu0 %v1626
        %v1751 = vpop.f32.mrb[0].mxu0
        %v1752 = vadd.f32 %v1653, %v1751
        %v1753 = vpop.f32.mrb[0].mxu0
        %1754 = vmatprep.mubr.f32.mxu0 %v1616
        %1755 = vmatmul.mubr.f32.gmra.mrb[0].mxu0 %v1625
        %v1756 = vpop.f32.mrb[0].mxu0
        %v1757 = vadd.f32 %v1653, %v1756
        %v1758 = vpop.f32.mrb[0].mxu0
        %1759 = vdwg.mxu0
        %1760 = vmatprep.subr.mxu0 0.0
        %1761 = vmatpush1.msra.mxu0 %v1593
        %1762 = vmatprep.subr.mxu0 0.0
        %1763 = vmatpush1.msra.mxu0 %v1594
        %1764 = vmatprep.subr.mxu0 0.0
        %1765 = vmatpush1.msra.mxu0 %v1595
        %1766 = vmatprep.subr.mxu0 0.0
        %1767 = vmatpush1.msra.mxu0 %v1596
        %1768 = vmatprep.subr.mxu0 0.0
        %1769 = vmatpush1.msra.mxu0 %v1597
        %1770 = vmatprep.subr.mxu0 0.0
        %1771 = vmatpush1.msra.mxu0 %v1598
        %1772 = vmatprep.subr.mxu0 0.0
        %1773 = vmatpush1.msra.mxu0 %v1599
        %1774 = vmatprep.subr.mxu0 0.0
        %1775 = vmatpush1.msra.mxu0 %v1600
        %1776 = vmatprep.subr.mxu0 0.0
        %1777 = vmatpush1.msra.mxu0 %v1601
        %1778 = vmatprep.subr.mxu0 0.0
        %1779 = vmatpush1.msra.mxu0 %v1602
        %1780 = vmatprep.subr.mxu0 0.0
        %1781 = vmatpush1.msra.mxu0 %v1603
        %1782 = vmatprep.subr.mxu0 0.0
        %1783 = vmatpush1.msra.mxu0 %v1604
        %1784 = vmatprep.subr.mxu0 0.0
        %1785 = vmatpush1.msra.mxu0 %v1605
        %1786 = vmatprep.subr.mxu0 0.0
        %1787 = vmatpush1.msra.mxu0 %v1606
        %1788 = vmatprep.subr.mxu0 0.0
        %1789 = vmatpush1.msra.mxu0 %v1607
        %1790 = vmatprep.subr.mxu0 0.0
        %1791 = vmatpush1.msra.mxu0 %v1608
        %1792 = vmatprep.subr.mxu0 0.0
        %1793 = vmatpush1.msra.mxu0 0.0
        %1794 = vmatprep.subr.mxu0 0.0
        %1795 = vmatpush1.msra.mxu0 0.0
        %1796 = vmatprep.subr.mxu0 0.0
        %1797 = vmatpush1.msra.mxu0 0.0
        %1798 = vmatprep.subr.mxu0 0.0
        %1799 = vmatpush1.msra.mxu0 0.0
        %1800 = vmatprep.subr.mxu0 0.0
        %1801 = vmatpush1.msra.mxu0 0.0
        %1802 = vmatprep.subr.mxu0 0.0
        %1803 = vmatpush1.msra.mxu0 0.0
        %1804 = vmatprep.subr.mxu0 0.0
        %1805 = vmatpush1.msra.mxu0 0.0
        %1806 = vmatprep.subr.mxu0 0.0
        %1807 = vmatpush1.msra.mxu0 0.0
        %1808 = vmatprep.subr.mxu0 0.0
        %1809 = vmatpush1.msra.mxu0 0.0
        %1810 = vmatprep.subr.mxu0 0.0
        %1811 = vmatpush1.msra.mxu0 0.0
        %1812 = vmatprep.subr.mxu0 0.0
        %1813 = vmatpush1.msra.mxu0 0.0
        %1814 = vmatprep.subr.mxu0 0.0
        %1815 = vmatpush1.msra.mxu0 0.0
        %1816 = vmatprep.subr.mxu0 0.0
        %1817 = vmatpush1.msra.mxu0 0.0
        %1818 = vmatprep.subr.mxu0 0.0
        %1819 = vmatpush1.msra.mxu0 0.0
        %1820 = vmatprep.subr.mxu0 0.0
        %1821 = vmatpush1.msra.mxu0 0.0
        %1822 = vmatprep.subr.mxu0 0.0
        %1823 = vmatpush1.msra.mxu0 0.0
        %1824 = vmatprep.mubr.f32.mxu0 0.0
        %1825 = vmatmul.mubr.f32.gmra.mrb[0].mxu0 %v1647
        %v1826 = vpop.f32.mrb[0].mxu0
        %v1827 = vadd.f32 %v1722, %v1826
        %v1828 = vpop.f32.mrb[0].mxu0
        %1829 = vmatprep.mubr.f32.mxu0 0.0
        %1830 = vmatmul.mubr.f32.gmra.mrb[0].mxu0 %v1646
        %v1831 = vpop.f32.mrb[0].mxu0
        %v1832 = vadd.f32 %v1727, %v1831
        %v1833 = vpop.f32.mrb[0].mxu0
        %1834 = vmatprep.mubr.f32.mxu0 0.0
        %1835 = vmatmul.mubr.f32.gmra.mrb[0].mxu0 %v1645
        %v1836 = vpop.f32.mrb[0].mxu0
        %v1837 = vadd.f32 %v1732, %v1836
        %v1838 = vpop.f32.mrb[0].mxu0
        %1839 = vmatprep.mubr.f32.mxu0 0.0
        %1840 = vmatmul.mubr.f32.gmra.mrb[0].mxu0 %v1644
        %v1841 = vpop.f32.mrb[0].mxu0
        %v1842 = vadd.f32 %v1737, %v1841
        %v1843 = vpop.f32.mrb[0].mxu0
        %1844 = vmatprep.mubr.f32.mxu0 0.0
        %1845 = vmatmul.mubr.f32.gmra.mrb[0].mxu0 %v1643
        %v1846 = vpop.f32.mrb[0].mxu0
        %v1847 = vadd.f32 %v1742, %v1846
        %v1848 = vpop.f32.mrb[0].mxu0
        %1849 = vmatprep.mubr.f32.mxu0 0.0
        %1850 = vmatmul.mubr.f32.gmra.mrb[0].mxu0 %v1642
        %v1851 = vpop.f32.mrb[0].mxu0
        %v1852 = vadd.f32 %v1747, %v1851
        %v1853 = vpop.f32.mrb[0].mxu0
        %1854 = vmatprep.mubr.f32.mxu0 0.0
        %1855 = vmatmul.mubr.f32.gmra.mrb[0].mxu0 %v1641
        %v1856 = vpop.f32.mrb[0].mxu0
        %v1857 = vadd.f32 %v1752, %v1856
        %v1858 = vpop.f32.mrb[0].mxu0
        %1859 = vmatprep.mubr.f32.mxu0 0.0
        %1860 = vmatmul.mubr.f32.gmra.mrb[0].mxu0 %v1648
        %v1861 = vpop.f32.mrb[0].mxu0
        %v1862 = vadd.f32 %v1757, %v1861
        %v1863 = vpop.f32.mrb[0].mxu0
        %1864 = vdwg.mxu0
        %v1865 = vadd.f32 %v1827, %v1197
        %v1866 = vadd.f32 %v1832, %v1198
        %v1867 = vadd.f32 %v1837, %v1199
        %v1868 = vadd.f32 %v1842, %v1200
        %v1869 = vadd.f32 %v1847, %v1201
        %v1870 = vadd.f32 %v1852, %v1202
        %v1871 = vadd.f32 %v1857, %v1203
        %v1872 = vadd.f32 %v1862, %v1204
        %vm1873 = vcmp.gt.f32.partialorder %v1865, 0.0
        %vm1874 = vcmp.gt.f32.partialorder %v1866, 0.0
        %vm1875 = vcmp.gt.f32.partialorder %v1867, 0.0
        %vm1876 = vcmp.gt.f32.partialorder %v1868, 0.0
        %vm1877 = vcmp.gt.f32.partialorder %v1869, 0.0
        %vm1878 = vcmp.gt.f32.partialorder %v1870, 0.0
        %vm1879 = vcmp.gt.f32.partialorder %v1871, 0.0
        %vm1880 = vcmp.gt.f32.partialorder %v1872, 0.0
        %v1881 = vmul.f32 %v1865, 0.1
        %v1882 = vmul.f32 %v1866, 0.1
        %v1883 = vmul.f32 %v1867, 0.1
        %v1884 = vmul.f32 %v1868, 0.1
        %v1885 = vmul.f32 %v1869, 0.1
        %v1886 = vmul.f32 %v1870, 0.1
        %v1887 = vmul.f32 %v1871, 0.1
        %v1888 = vmul.f32 %v1872, 0.1
        %v1889 = vsel %vm1873, %v1865, %v1881
        %v1890 = vsel %vm1874, %v1866, %v1882
        %v1891 = vsel %vm1875, %v1867, %v1883
        %v1892 = vsel %vm1876, %v1868, %v1884
        %v1893 = vsel %vm1877, %v1869, %v1885
        %v1894 = vsel %vm1878, %v1870, %v1886
        %v1895 = vsel %vm1879, %v1871, %v1887
        %v1896 = vsel %vm1880, %v1872, %v1888
        %s1897 = scalar_lea.vmem [#allocation8], 768
        %v1898 = vld [vmem:[%s1897] sm:$0xff]
        %v1899 = vld [vmem:[%s1897 + $0x8] sm:$0xff]
        %v1900 = vld [vmem:[%s1897 + $0x10] sm:$0xff]
        %v1901 = vld [vmem:[%s1897 + $0x18] sm:$0xff]
        %v1902 = vld [vmem:[%s1897 + $0x20] sm:$0xff]
        %v1903 = vld [vmem:[%s1897 + $0x28] sm:$0xff]
        %v1904 = vld [vmem:[%s1897 + $0x30] sm:$0xff]
        %v1905 = vld [vmem:[%s1897 + $0x38] sm:$0xff]
        %v1906 = vld [vmem:[%s1897 + $0x40] sm:$0xff]
        %v1907 = vld [vmem:[%s1897 + $0x48] sm:$0xff]
        %v1908 = vld [vmem:[%s1897 + $0x50] sm:$0xff]
        %v1909 = vld [vmem:[%s1897 + $0x58] sm:$0xff]
        %v1910 = vld [vmem:[%s1897 + $0x60] sm:$0xff]
        %v1911 = vld [vmem:[%s1897 + $0x68] sm:$0xff]
        %v1912 = vld [vmem:[%s1897 + $0x70] sm:$0xff]
        %v1913 = vld [vmem:[%s1897 + $0x78] sm:$0xff]
        %v1914 = vld [vmem:[%s1897 + $0x80] sm:$0xff]
        %v1915 = vld [vmem:[%s1897 + $0x88] sm:$0xff]
        %v1916 = vld [vmem:[%s1897 + $0x90] sm:$0xff]
        %v1917 = vld [vmem:[%s1897 + $0x98] sm:$0xff]
        %v1918 = vld [vmem:[%s1897 + $0xa0] sm:$0xff]
        %v1919 = vld [vmem:[%s1897 + $0xa8] sm:$0xff]
        %v1920 = vld [vmem:[%s1897 + $0xb0] sm:$0xff]
        %v1921 = vld [vmem:[%s1897 + $0xb8] sm:$0xff]
        %v1922 = vld [vmem:[%s1897 + $0xc0] sm:$0xff]
        %v1923 = vld [vmem:[%s1897 + $0xc8] sm:$0xff]
        %v1924 = vld [vmem:[%s1897 + $0xd0] sm:$0xff]
        %v1925 = vld [vmem:[%s1897 + $0xd8] sm:$0xff]
        %v1926 = vld [vmem:[%s1897 + $0xe0] sm:$0xff]
        %v1927 = vld [vmem:[%s1897 + $0xe8] sm:$0xff]
        %v1928 = vld [vmem:[%s1897 + $0xf0] sm:$0xff]
        %v1929 = vld [vmem:[%s1897 + $0xf8] sm:$0xff]
        %v1930 = vld [vmem:[%s1897 + $0x100] sm:$0xff]
        %v1931 = vld [vmem:[%s1897 + $0x108] sm:$0xff]
        %v1932 = vld [vmem:[%s1897 + $0x110] sm:$0xff]
        %v1933 = vld [vmem:[%s1897 + $0x118] sm:$0xff]
        %v1934 = vld [vmem:[%s1897 + $0x120] sm:$0xff]
        %v1935 = vld [vmem:[%s1897 + $0x128] sm:$0xff]
        %v1936 = vld [vmem:[%s1897 + $0x130] sm:$0xff]
        %v1937 = vld [vmem:[%s1897 + $0x138] sm:$0xff]
        %v1938 = vld [vmem:[%s1897 + $0x140] sm:$0xff]
        %v1939 = vld [vmem:[%s1897 + $0x148] sm:$0xff]
        %v1940 = vld [vmem:[%s1897 + $0x150] sm:$0xff]
        %v1941 = vld [vmem:[%s1897 + $0x158] sm:$0xff]
        %v1942 = vld [vmem:[%s1897 + $0x160] sm:$0xff]
        %v1943 = vld [vmem:[%s1897 + $0x168] sm:$0xff]
        %v1944 = vld [vmem:[%s1897 + $0x170] sm:$0xff]
        %v1945 = vld [vmem:[%s1897 + $0x178] sm:$0xff]
        %v1946 = vmul.f32 %v1889, %v525
        %v1947 = vmul.f32 %v1890, %v526
        %v1948 = vmul.f32 %v1891, %v527
        %v1949 = vmul.f32 %v1892, %v528
        %v1950 = vmul.f32 %v1893, %v529
        %v1951 = vmul.f32 %v1894, %v530
        %v1952 = vmul.f32 %v1895, %v531
        %v1953 = vmul.f32 %v1896, %v532
        %v1954 = vrot.slane %v1946, 3
        %v1955 = vrot.slane %v1947, 3
        %v1956 = vrot.slane %v1948, 3
        %v1957 = vrot.slane %v1949, 3
        %v1958 = vrot.slane %v1950, 3
        %v1959 = vrot.slane %v1951, 3
        %v1960 = vrot.slane %v1952, 3
        %v1961 = vrot.slane %v1953, 3
        %v1962 = vsel %vm1311, %v1960, %v1961
        %v1963 = vsel %vm1311, %v1959, %v1960
        %v1964 = vsel %vm1311, %v1958, %v1959
        %v1965 = vsel %vm1311, %v1957, %v1958
        %v1966 = vsel %vm1311, %v1956, %v1957
        %v1967 = vsel %vm1311, %v1955, %v1956
        %v1968 = vsel %vm1311, %v1954, %v1955
        %v1969 = vsel %vm1311, %v1961, %v1954
        %v1970 = vrot.slane %v1946, 5
        %v1971 = vrot.slane %v1947, 5
        %v1972 = vrot.slane %v1948, 5
        %v1973 = vrot.slane %v1949, 5
        %v1974 = vrot.slane %v1950, 5
        %v1975 = vrot.slane %v1951, 5
        %v1976 = vrot.slane %v1952, 5
        %v1977 = vrot.slane %v1953, 5
        %v1978 = vsel %vm1294, %v1976, %v1977
        %v1979 = vsel %vm1294, %v1975, %v1976
        %v1980 = vsel %vm1294, %v1974, %v1975
        %v1981 = vsel %vm1294, %v1973, %v1974
        %v1982 = vsel %vm1294, %v1972, %v1973
        %v1983 = vsel %vm1294, %v1971, %v1972
        %v1984 = vsel %vm1294, %v1970, %v1971
        %v1985 = vsel %vm1294, %v1977, %v1970
        %v1987 = vlaneseq
        %v1988 = vshrl.u32 %v1987, 7
        %v1989 = vsub.s32 0, %v1988
        %v1990 = vrot.slane %v535, %v1989
        %1992 = vmatprep.subr.mxu0 0.0
        %1993 = vmatpush1.msra.mxu0 %v1898
        %1994 = vmatprep.subr.mxu0 0.0
        %1995 = vmatpush1.msra.mxu0 %v1899
        %1996 = vmatprep.subr.mxu0 0.0
        %1997 = vmatpush1.msra.mxu0 %v1900
        %1998 = vmatprep.subr.mxu0 0.0
        %1999 = vmatpush1.msra.mxu0 %v1901
        %2000 = vmatprep.subr.mxu0 0.0
        %2001 = vmatpush1.msra.mxu0 %v1902
        %2002 = vmatprep.subr.mxu0 0.0
        %2003 = vmatpush1.msra.mxu0 %v1903
        %2004 = vmatprep.subr.mxu0 0.0
        %2005 = vmatpush1.msra.mxu0 %v1904
        %2006 = vmatprep.subr.mxu0 0.0
        %2007 = vmatpush1.msra.mxu0 %v1905
        %2008 = vmatprep.subr.mxu0 0.0
        %2009 = vmatpush1.msra.mxu0 %v1906
        %2010 = vmatprep.subr.mxu0 0.0
        %2011 = vmatpush1.msra.mxu0 %v1907
        %2012 = vmatprep.subr.mxu0 0.0
        %2013 = vmatpush1.msra.mxu0 %v1908
        %2014 = vmatprep.subr.mxu0 0.0
        %2015 = vmatpush1.msra.mxu0 %v1909
        %2016 = vmatprep.subr.mxu0 0.0
        %2017 = vmatpush1.msra.mxu0 %v1910
        %2018 = vmatprep.subr.mxu0 0.0
        %2019 = vmatpush1.msra.mxu0 %v1911
        %2020 = vmatprep.subr.mxu0 0.0
        %2021 = vmatpush1.msra.mxu0 %v1912
        %2022 = vmatprep.subr.mxu0 0.0
        %2023 = vmatpush1.msra.mxu0 %v1913
        %2024 = vmatprep.subr.mxu0 0.0
        %2025 = vmatpush1.msra.mxu0 %v1914
        %2026 = vmatprep.subr.mxu0 0.0
        %2027 = vmatpush1.msra.mxu0 %v1915
        %2028 = vmatprep.subr.mxu0 0.0
        %2029 = vmatpush1.msra.mxu0 %v1916
        %2030 = vmatprep.subr.mxu0 0.0
        %2031 = vmatpush1.msra.mxu0 %v1917
        %2032 = vmatprep.subr.mxu0 0.0
        %2033 = vmatpush1.msra.mxu0 %v1918
        %2034 = vmatprep.subr.mxu0 0.0
        %2035 = vmatpush1.msra.mxu0 %v1919
        %2036 = vmatprep.subr.mxu0 0.0
        %2037 = vmatpush1.msra.mxu0 %v1920
        %2038 = vmatprep.subr.mxu0 0.0
        %2039 = vmatpush1.msra.mxu0 %v1921
        %2040 = vmatprep.subr.mxu0 0.0
        %2041 = vmatpush1.msra.mxu0 %v1922
        %2042 = vmatprep.subr.mxu0 0.0
        %2043 = vmatpush1.msra.mxu0 %v1923
        %2044 = vmatprep.subr.mxu0 0.0
        %2045 = vmatpush1.msra.mxu0 %v1924
        %2046 = vmatprep.subr.mxu0 0.0
        %2047 = vmatpush1.msra.mxu0 %v1925
        %2048 = vmatprep.subr.mxu0 0.0
        %2049 = vmatpush1.msra.mxu0 %v1926
        %2050 = vmatprep.subr.mxu0 0.0
        %2051 = vmatpush1.msra.mxu0 %v1927
        %2052 = vmatprep.subr.mxu0 0.0
        %2053 = vmatpush1.msra.mxu0 %v1928
        %2054 = vmatprep.subr.mxu0 0.0
        %2055 = vmatpush1.msra.mxu0 %v1929
        %2056 = vmatprep.mubr.f32.mxu0 %v1946
        %2057 = vmatmul.mubr.f32.gmra.mrb[0].mxu0 %v1969
        %v2058 = vpop.f32.mrb[0].mxu0
        %v2059 = vadd.f32 %v1990, %v2058
        %v2060 = vpop.f32.mrb[0].mxu0
        %2061 = vmatprep.mubr.f32.mxu0 %v1947
        %2062 = vmatmul.mubr.f32.gmra.mrb[0].mxu0 %v1968
        %v2063 = vpop.f32.mrb[0].mxu0
        %v2064 = vadd.f32 %v1990, %v2063
        %v2065 = vpop.f32.mrb[0].mxu0
        %2066 = vmatprep.mubr.f32.mxu0 %v1948
        %2067 = vmatmul.mubr.f32.gmra.mrb[0].mxu0 %v1967
        %v2068 = vpop.f32.mrb[0].mxu0
        %v2069 = vadd.f32 %v1990, %v2068
        %v2070 = vpop.f32.mrb[0].mxu0
        %2071 = vmatprep.mubr.f32.mxu0 %v1949
        %2072 = vmatmul.mubr.f32.gmra.mrb[0].mxu0 %v1966
        %v2073 = vpop.f32.mrb[0].mxu0
        %v2074 = vadd.f32 %v1990, %v2073
        %v2075 = vpop.f32.mrb[0].mxu0
        %2076 = vmatprep.mubr.f32.mxu0 %v1950
        %2077 = vmatmul.mubr.f32.gmra.mrb[0].mxu0 %v1965
        %v2078 = vpop.f32.mrb[0].mxu0
        %v2079 = vadd.f32 %v1990, %v2078
        %v2080 = vpop.f32.mrb[0].mxu0
        %2081 = vmatprep.mubr.f32.mxu0 %v1951
        %2082 = vmatmul.mubr.f32.gmra.mrb[0].mxu0 %v1964
        %v2083 = vpop.f32.mrb[0].mxu0
        %v2084 = vadd.f32 %v1990, %v2083
        %v2085 = vpop.f32.mrb[0].mxu0
        %2086 = vmatprep.mubr.f32.mxu0 %v1952
        %2087 = vmatmul.mubr.f32.gmra.mrb[0].mxu0 %v1963
        %v2088 = vpop.f32.mrb[0].mxu0
        %v2089 = vadd.f32 %v1990, %v2088
        %v2090 = vpop.f32.mrb[0].mxu0
        %2091 = vmatprep.mubr.f32.mxu0 %v1953
        %2092 = vmatmul.mubr.f32.gmra.mrb[0].mxu0 %v1962
        %v2093 = vpop.f32.mrb[0].mxu0
        %v2094 = vadd.f32 %v1990, %v2093
        %v2095 = vpop.f32.mrb[0].mxu0
        %2096 = vdwg.mxu0
        %2097 = vmatprep.subr.mxu0 0.0
        %2098 = vmatpush1.msra.mxu0 %v1930
        %2099 = vmatprep.subr.mxu0 0.0
        %2100 = vmatpush1.msra.mxu0 %v1931
        %2101 = vmatprep.subr.mxu0 0.0
        %2102 = vmatpush1.msra.mxu0 %v1932
        %2103 = vmatprep.subr.mxu0 0.0
        %2104 = vmatpush1.msra.mxu0 %v1933
        %2105 = vmatprep.subr.mxu0 0.0
        %2106 = vmatpush1.msra.mxu0 %v1934
        %2107 = vmatprep.subr.mxu0 0.0
        %2108 = vmatpush1.msra.mxu0 %v1935
        %2109 = vmatprep.subr.mxu0 0.0
        %2110 = vmatpush1.msra.mxu0 %v1936
        %2111 = vmatprep.subr.mxu0 0.0
        %2112 = vmatpush1.msra.mxu0 %v1937
        %2113 = vmatprep.subr.mxu0 0.0
        %2114 = vmatpush1.msra.mxu0 %v1938
        %2115 = vmatprep.subr.mxu0 0.0
        %2116 = vmatpush1.msra.mxu0 %v1939
        %2117 = vmatprep.subr.mxu0 0.0
        %2118 = vmatpush1.msra.mxu0 %v1940
        %2119 = vmatprep.subr.mxu0 0.0
        %2120 = vmatpush1.msra.mxu0 %v1941
        %2121 = vmatprep.subr.mxu0 0.0
        %2122 = vmatpush1.msra.mxu0 %v1942
        %2123 = vmatprep.subr.mxu0 0.0
        %2124 = vmatpush1.msra.mxu0 %v1943
        %2125 = vmatprep.subr.mxu0 0.0
        %2126 = vmatpush1.msra.mxu0 %v1944
        %2127 = vmatprep.subr.mxu0 0.0
        %2128 = vmatpush1.msra.mxu0 %v1945
        %2129 = vmatprep.subr.mxu0 0.0
        %2130 = vmatpush1.msra.mxu0 0.0
        %2131 = vmatprep.subr.mxu0 0.0
        %2132 = vmatpush1.msra.mxu0 0.0
        %2133 = vmatprep.subr.mxu0 0.0
        %2134 = vmatpush1.msra.mxu0 0.0
        %2135 = vmatprep.subr.mxu0 0.0
        %2136 = vmatpush1.msra.mxu0 0.0
        %2137 = vmatprep.subr.mxu0 0.0
        %2138 = vmatpush1.msra.mxu0 0.0
        %2139 = vmatprep.subr.mxu0 0.0
        %2140 = vmatpush1.msra.mxu0 0.0
        %2141 = vmatprep.subr.mxu0 0.0
        %2142 = vmatpush1.msra.mxu0 0.0
        %2143 = vmatprep.subr.mxu0 0.0
        %2144 = vmatpush1.msra.mxu0 0.0
        %2145 = vmatprep.subr.mxu0 0.0
        %2146 = vmatpush1.msra.mxu0 0.0
        %2147 = vmatprep.subr.mxu0 0.0
        %2148 = vmatpush1.msra.mxu0 0.0
        %2149 = vmatprep.subr.mxu0 0.0
        %2150 = vmatpush1.msra.mxu0 0.0
        %2151 = vmatprep.subr.mxu0 0.0
        %2152 = vmatpush1.msra.mxu0 0.0
        %2153 = vmatprep.subr.mxu0 0.0
        %2154 = vmatpush1.msra.mxu0 0.0
        %2155 = vmatprep.subr.mxu0 0.0
        %2156 = vmatpush1.msra.mxu0 0.0
        %2157 = vmatprep.subr.mxu0 0.0
        %2158 = vmatpush1.msra.mxu0 0.0
        %2159 = vmatprep.subr.mxu0 0.0
        %2160 = vmatpush1.msra.mxu0 0.0
        %2161 = vmatprep.mubr.f32.mxu0 0.0
        %2162 = vmatmul.mubr.f32.gmra.mrb[0].mxu0 %v1984
        %v2163 = vpop.f32.mrb[0].mxu0
        %v2164 = vadd.f32 %v2059, %v2163
        %v2165 = vpop.f32.mrb[0].mxu0
        %2166 = vmatprep.mubr.f32.mxu0 0.0
        %2167 = vmatmul.mubr.f32.gmra.mrb[0].mxu0 %v1983
        %v2168 = vpop.f32.mrb[0].mxu0
        %v2169 = vadd.f32 %v2064, %v2168
        %v2170 = vpop.f32.mrb[0].mxu0
        %2171 = vmatprep.mubr.f32.mxu0 0.0
        %2172 = vmatmul.mubr.f32.gmra.mrb[0].mxu0 %v1982
        %v2173 = vpop.f32.mrb[0].mxu0
        %v2174 = vadd.f32 %v2069, %v2173
        %v2175 = vpop.f32.mrb[0].mxu0
        %2176 = vmatprep.mubr.f32.mxu0 0.0
        %2177 = vmatmul.mubr.f32.gmra.mrb[0].mxu0 %v1981
        %v2178 = vpop.f32.mrb[0].mxu0
        %v2179 = vadd.f32 %v2074, %v2178
        %v2180 = vpop.f32.mrb[0].mxu0
        %2181 = vmatprep.mubr.f32.mxu0 0.0
        %2182 = vmatmul.mubr.f32.gmra.mrb[0].mxu0 %v1980
        %v2183 = vpop.f32.mrb[0].mxu0
        %v2184 = vadd.f32 %v2079, %v2183
        %v2185 = vpop.f32.mrb[0].mxu0
        %2186 = vmatprep.mubr.f32.mxu0 0.0
        %2187 = vmatmul.mubr.f32.gmra.mrb[0].mxu0 %v1979
        %v2188 = vpop.f32.mrb[0].mxu0
        %v2189 = vadd.f32 %v2084, %v2188
        %v2190 = vpop.f32.mrb[0].mxu0
        %2191 = vmatprep.mubr.f32.mxu0 0.0
        %2192 = vmatmul.mubr.f32.gmra.mrb[0].mxu0 %v1978
        %v2193 = vpop.f32.mrb[0].mxu0
        %v2194 = vadd.f32 %v2089, %v2193
        %v2195 = vpop.f32.mrb[0].mxu0
        %2196 = vmatprep.mubr.f32.mxu0 0.0
        %2197 = vmatmul.mubr.f32.gmra.mrb[0].mxu0 %v1985
        %v2198 = vpop.f32.mrb[0].mxu0
        %v2199 = vadd.f32 %v2094, %v2198
        %v2200 = vpop.f32.mrb[0].mxu0
        %2201 = vdwg.mxu0
        %vm2202 = vcmp.gt.f32.partialorder %v2164, 0.0
        %vm2203 = vcmp.gt.f32.partialorder %v2169, 0.0
        %vm2204 = vcmp.gt.f32.partialorder %v2174, 0.0
        %vm2205 = vcmp.gt.f32.partialorder %v2179, 0.0
        %vm2206 = vcmp.gt.f32.partialorder %v2184, 0.0
        %vm2207 = vcmp.gt.f32.partialorder %v2189, 0.0
        %vm2208 = vcmp.gt.f32.partialorder %v2194, 0.0
        %vm2209 = vcmp.gt.f32.partialorder %v2199, 0.0
        %v2210 = vmul.f32 %v2164, 0.1
        %v2211 = vmul.f32 %v2169, 0.1
        %v2212 = vmul.f32 %v2174, 0.1
        %v2213 = vmul.f32 %v2179, 0.1
        %v2214 = vmul.f32 %v2184, 0.1
        %v2215 = vmul.f32 %v2189, 0.1
        %v2216 = vmul.f32 %v2194, 0.1
        %v2217 = vmul.f32 %v2199, 0.1
        %v2218 = vsel %vm2202, %v2164, %v2210
        %v2219 = vsel %vm2203, %v2169, %v2211
        %v2220 = vsel %vm2204, %v2174, %v2212
        %v2221 = vsel %vm2205, %v2179, %v2213
        %v2222 = vsel %vm2206, %v2184, %v2214
        %v2223 = vsel %vm2207, %v2189, %v2215
        %v2224 = vsel %vm2208, %v2194, %v2216
        %v2225 = vsel %vm2209, %v2199, %v2217
        %s2226 = scalar_lea.vmem [#allocation10], 768
        %v2227 = vld [vmem:[%s2226] sm:$0xff]
        %v2228 = vld [vmem:[%s2226 + $0x8] sm:$0xff]
        %v2229 = vld [vmem:[%s2226 + $0x10] sm:$0xff]
        %v2230 = vld [vmem:[%s2226 + $0x18] sm:$0xff]
        %v2231 = vld [vmem:[%s2226 + $0x20] sm:$0xff]
        %v2232 = vld [vmem:[%s2226 + $0x28] sm:$0xff]
        %v2233 = vld [vmem:[%s2226 + $0x30] sm:$0xff]
        %v2234 = vld [vmem:[%s2226 + $0x38] sm:$0xff]
        %v2235 = vld [vmem:[%s2226 + $0x40] sm:$0xff]
        %v2236 = vld [vmem:[%s2226 + $0x48] sm:$0xff]
        %v2237 = vld [vmem:[%s2226 + $0x50] sm:$0xff]
        %v2238 = vld [vmem:[%s2226 + $0x58] sm:$0xff]
        %v2239 = vld [vmem:[%s2226 + $0x60] sm:$0xff]
        %v2240 = vld [vmem:[%s2226 + $0x68] sm:$0xff]
        %v2241 = vld [vmem:[%s2226 + $0x70] sm:$0xff]
        %v2242 = vld [vmem:[%s2226 + $0x78] sm:$0xff]
        %v2243 = vld [vmem:[%s2226 + $0x80] sm:$0xff]
        %v2244 = vld [vmem:[%s2226 + $0x88] sm:$0xff]
        %v2245 = vld [vmem:[%s2226 + $0x90] sm:$0xff]
        %v2246 = vld [vmem:[%s2226 + $0x98] sm:$0xff]
        %v2247 = vld [vmem:[%s2226 + $0xa0] sm:$0xff]
        %v2248 = vld [vmem:[%s2226 + $0xa8] sm:$0xff]
        %v2249 = vld [vmem:[%s2226 + $0xb0] sm:$0xff]
        %v2250 = vld [vmem:[%s2226 + $0xb8] sm:$0xff]
        %v2251 = vld [vmem:[%s2226 + $0xc0] sm:$0xff]
        %v2252 = vld [vmem:[%s2226 + $0xc8] sm:$0xff]
        %v2253 = vld [vmem:[%s2226 + $0xd0] sm:$0xff]
        %v2254 = vld [vmem:[%s2226 + $0xd8] sm:$0xff]
        %v2255 = vld [vmem:[%s2226 + $0xe0] sm:$0xff]
        %v2256 = vld [vmem:[%s2226 + $0xe8] sm:$0xff]
        %v2257 = vld [vmem:[%s2226 + $0xf0] sm:$0xff]
        %v2258 = vld [vmem:[%s2226 + $0xf8] sm:$0xff]
        %v2259 = vld [vmem:[%s2226 + $0x100] sm:$0xff]
        %v2260 = vld [vmem:[%s2226 + $0x108] sm:$0xff]
        %v2261 = vld [vmem:[%s2226 + $0x110] sm:$0xff]
        %v2262 = vld [vmem:[%s2226 + $0x118] sm:$0xff]
        %v2263 = vld [vmem:[%s2226 + $0x120] sm:$0xff]
        %v2264 = vld [vmem:[%s2226 + $0x128] sm:$0xff]
        %v2265 = vld [vmem:[%s2226 + $0x130] sm:$0xff]
        %v2266 = vld [vmem:[%s2226 + $0x138] sm:$0xff]
        %v2267 = vld [vmem:[%s2226 + $0x140] sm:$0xff]
        %v2268 = vld [vmem:[%s2226 + $0x148] sm:$0xff]
        %v2269 = vld [vmem:[%s2226 + $0x150] sm:$0xff]
        %v2270 = vld [vmem:[%s2226 + $0x158] sm:$0xff]
        %v2271 = vld [vmem:[%s2226 + $0x160] sm:$0xff]
        %v2272 = vld [vmem:[%s2226 + $0x168] sm:$0xff]
        %v2273 = vld [vmem:[%s2226 + $0x170] sm:$0xff]
        %v2274 = vld [vmem:[%s2226 + $0x178] sm:$0xff]
        %v2275 = vmul.f32 %v2218, %v525
        %v2276 = vmul.f32 %v2219, %v526
        %v2277 = vmul.f32 %v2220, %v527
        %v2278 = vmul.f32 %v2221, %v528
        %v2279 = vmul.f32 %v2222, %v529
        %v2280 = vmul.f32 %v2223, %v530
        %v2281 = vmul.f32 %v2224, %v531
        %v2282 = vmul.f32 %v2225, %v532
        %v2283 = vrot.slane %v2275, 7
        %v2284 = vrot.slane %v2276, 7
        %v2285 = vrot.slane %v2277, 7
        %v2286 = vrot.slane %v2278, 7
        %v2287 = vrot.slane %v2279, 7
        %v2288 = vrot.slane %v2280, 7
        %v2289 = vrot.slane %v2281, 7
        %v2290 = vrot.slane %v2282, 7
        %v2291 = vsel %vm627, %v2289, %v2290
        %v2292 = vsel %vm627, %v2288, %v2289
        %v2293 = vsel %vm627, %v2287, %v2288
        %v2294 = vsel %vm627, %v2286, %v2287
        %v2295 = vsel %vm627, %v2285, %v2286
        %v2296 = vsel %vm627, %v2284, %v2285
        %v2297 = vsel %vm627, %v2283, %v2284
        %v2298 = vsel %vm627, %v2290, %v2283
        %v2299 = vrot.slane %v2275, 1
        %v2300 = vrot.slane %v2276, 1
        %v2301 = vrot.slane %v2277, 1
        %v2302 = vrot.slane %v2278, 1
        %v2303 = vrot.slane %v2279, 1
        %v2304 = vrot.slane %v2280, 1
        %v2305 = vrot.slane %v2281, 1
        %v2306 = vrot.slane %v2282, 1
        %v2307 = vsel %vm644, %v2305, %v2306
        %v2308 = vsel %vm644, %v2304, %v2305
        %v2309 = vsel %vm644, %v2303, %v2304
        %v2310 = vsel %vm644, %v2302, %v2303
        %v2311 = vsel %vm644, %v2301, %v2302
        %v2312 = vsel %vm644, %v2300, %v2301
        %v2313 = vsel %vm644, %v2299, %v2300
        %v2314 = vsel %vm644, %v2306, %v2299
        %v2316 = vlaneseq
        %v2317 = vshrl.u32 %v2316, 7
        %v2318 = vsub.s32 0, %v2317
        %v2319 = vrot.slane %v538, %v2318
        %2321 = vmatprep.subr.mxu0 0.0
        %2322 = vmatpush1.msra.mxu0 %v2227
        %2323 = vmatprep.subr.mxu0 0.0
        %2324 = vmatpush1.msra.mxu0 %v2228
        %2325 = vmatprep.subr.mxu0 0.0
        %2326 = vmatpush1.msra.mxu0 %v2229
        %2327 = vmatprep.subr.mxu0 0.0
        %2328 = vmatpush1.msra.mxu0 %v2230
        %2329 = vmatprep.subr.mxu0 0.0
        %2330 = vmatpush1.msra.mxu0 %v2231
        %2331 = vmatprep.subr.mxu0 0.0
        %2332 = vmatpush1.msra.mxu0 %v2232
        %2333 = vmatprep.subr.mxu0 0.0
        %2334 = vmatpush1.msra.mxu0 %v2233
        %2335 = vmatprep.subr.mxu0 0.0
        %2336 = vmatpush1.msra.mxu0 %v2234
        %2337 = vmatprep.subr.mxu0 0.0
        %2338 = vmatpush1.msra.mxu0 %v2235
        %2339 = vmatprep.subr.mxu0 0.0
        %2340 = vmatpush1.msra.mxu0 %v2236
        %2341 = vmatprep.subr.mxu0 0.0
        %2342 = vmatpush1.msra.mxu0 %v2237
        %2343 = vmatprep.subr.mxu0 0.0
        %2344 = vmatpush1.msra.mxu0 %v2238
        %2345 = vmatprep.subr.mxu0 0.0
        %2346 = vmatpush1.msra.mxu0 %v2239
        %2347 = vmatprep.subr.mxu0 0.0
        %2348 = vmatpush1.msra.mxu0 %v2240
        %2349 = vmatprep.subr.mxu0 0.0
        %2350 = vmatpush1.msra.mxu0 %v2241
        %2351 = vmatprep.subr.mxu0 0.0
        %2352 = vmatpush1.msra.mxu0 %v2242
        %2353 = vmatprep.subr.mxu0 0.0
        %2354 = vmatpush1.msra.mxu0 %v2243
        %2355 = vmatprep.subr.mxu0 0.0
        %2356 = vmatpush1.msra.mxu0 %v2244
        %2357 = vmatprep.subr.mxu0 0.0
        %2358 = vmatpush1.msra.mxu0 %v2245
        %2359 = vmatprep.subr.mxu0 0.0
        %2360 = vmatpush1.msra.mxu0 %v2246
        %2361 = vmatprep.subr.mxu0 0.0
        %2362 = vmatpush1.msra.mxu0 %v2247
        %2363 = vmatprep.subr.mxu0 0.0
        %2364 = vmatpush1.msra.mxu0 %v2248
        %2365 = vmatprep.subr.mxu0 0.0
        %2366 = vmatpush1.msra.mxu0 %v2249
        %2367 = vmatprep.subr.mxu0 0.0
        %2368 = vmatpush1.msra.mxu0 %v2250
        %2369 = vmatprep.subr.mxu0 0.0
        %2370 = vmatpush1.msra.mxu0 %v2251
        %2371 = vmatprep.subr.mxu0 0.0
        %2372 = vmatpush1.msra.mxu0 %v2252
        %2373 = vmatprep.subr.mxu0 0.0
        %2374 = vmatpush1.msra.mxu0 %v2253
        %2375 = vmatprep.subr.mxu0 0.0
        %2376 = vmatpush1.msra.mxu0 %v2254
        %2377 = vmatprep.subr.mxu0 0.0
        %2378 = vmatpush1.msra.mxu0 %v2255
        %2379 = vmatprep.subr.mxu0 0.0
        %2380 = vmatpush1.msra.mxu0 %v2256
        %2381 = vmatprep.subr.mxu0 0.0
        %2382 = vmatpush1.msra.mxu0 %v2257
        %2383 = vmatprep.subr.mxu0 0.0
        %2384 = vmatpush1.msra.mxu0 %v2258
        %2385 = vmatprep.mubr.f32.mxu0 %v2275
        %2386 = vmatmul.mubr.f32.gmra.mrb[0].mxu0 %v2298
        %v2387 = vpop.f32.mrb[0].mxu0
        %v2388 = vpop.f32.mrb[0].mxu0
        %2389 = vmatprep.mubr.f32.mxu0 %v2276
        %2390 = vmatmul.mubr.f32.gmra.mrb[0].mxu0 %v2297
        %v2391 = vpop.f32.mrb[0].mxu0
        %v2392 = vpop.f32.mrb[0].mxu0
        %2393 = vmatprep.mubr.f32.mxu0 %v2277
        %2394 = vmatmul.mubr.f32.gmra.mrb[0].mxu0 %v2296
        %v2395 = vpop.f32.mrb[0].mxu0
        %v2396 = vadd.f32 %v2319, %v2395
        %v2397 = vpop.f32.mrb[0].mxu0
        %2398 = vmatprep.mubr.f32.mxu0 %v2278
        %2399 = vmatmul.mubr.f32.gmra.mrb[0].mxu0 %v2295
        %v2400 = vpop.f32.mrb[0].mxu0
        %v2401 = vadd.f32 %v2319, %v2400
        %v2402 = vpop.f32.mrb[0].mxu0
        %2403 = vmatprep.mubr.f32.mxu0 %v2279
        %2404 = vmatmul.mubr.f32.gmra.mrb[0].mxu0 %v2294
        %v2405 = vpop.f32.mrb[0].mxu0
        %v2406 = vadd.f32 %v2319, %v2405
        %v2407 = vpop.f32.mrb[0].mxu0
        %2408 = vmatprep.mubr.f32.mxu0 %v2280
        %2409 = vmatmul.mubr.f32.gmra.mrb[0].mxu0 %v2293
        %v2410 = vpop.f32.mrb[0].mxu0
        %v2411 = vadd.f32 %v2319, %v2410
        %v2412 = vpop.f32.mrb[0].mxu0
        %2413 = vmatprep.mubr.f32.mxu0 %v2281
        %2414 = vmatmul.mubr.f32.gmra.mrb[0].mxu0 %v2292
        %v2415 = vpop.f32.mrb[0].mxu0
        %v2416 = vpop.f32.mrb[0].mxu0
        %2417 = vmatprep.mubr.f32.mxu0 %v2282
        %2418 = vmatmul.mubr.f32.gmra.mrb[0].mxu0 %v2291
        %v2419 = vpop.f32.mrb[0].mxu0
        %v2420 = vpop.f32.mrb[0].mxu0
        %2421 = vdwg.mxu0
        %2422 = vmatprep.subr.mxu0 0.0
        %2423 = vmatpush1.msra.mxu0 %v2259
        %2424 = vmatprep.subr.mxu0 0.0
        %2425 = vmatpush1.msra.mxu0 %v2260
        %2426 = vmatprep.subr.mxu0 0.0
        %2427 = vmatpush1.msra.mxu0 %v2261
        %2428 = vmatprep.subr.mxu0 0.0
        %2429 = vmatpush1.msra.mxu0 %v2262
        %2430 = vmatprep.subr.mxu0 0.0
        %2431 = vmatpush1.msra.mxu0 %v2263
        %2432 = vmatprep.subr.mxu0 0.0
        %2433 = vmatpush1.msra.mxu0 %v2264
        %2434 = vmatprep.subr.mxu0 0.0
        %2435 = vmatpush1.msra.mxu0 %v2265
        %2436 = vmatprep.subr.mxu0 0.0
        %2437 = vmatpush1.msra.mxu0 %v2266
        %2438 = vmatprep.subr.mxu0 0.0
        %2439 = vmatpush1.msra.mxu0 %v2267
        %2440 = vmatprep.subr.mxu0 0.0
        %2441 = vmatpush1.msra.mxu0 %v2268
        %2442 = vmatprep.subr.mxu0 0.0
        %2443 = vmatpush1.msra.mxu0 %v2269
        %2444 = vmatprep.subr.mxu0 0.0
        %2445 = vmatpush1.msra.mxu0 %v2270
        %2446 = vmatprep.subr.mxu0 0.0
        %2447 = vmatpush1.msra.mxu0 %v2271
        %2448 = vmatprep.subr.mxu0 0.0
        %2449 = vmatpush1.msra.mxu0 %v2272
        %2450 = vmatprep.subr.mxu0 0.0
        %2451 = vmatpush1.msra.mxu0 %v2273
        %2452 = vmatprep.subr.mxu0 0.0
        %2453 = vmatpush1.msra.mxu0 %v2274
        %2454 = vmatprep.subr.mxu0 0.0
        %2455 = vmatpush1.msra.mxu0 0.0
        %2456 = vmatprep.subr.mxu0 0.0
        %2457 = vmatpush1.msra.mxu0 0.0
        %2458 = vmatprep.subr.mxu0 0.0
        %2459 = vmatpush1.msra.mxu0 0.0
        %2460 = vmatprep.subr.mxu0 0.0
        %2461 = vmatpush1.msra.mxu0 0.0
        %2462 = vmatprep.subr.mxu0 0.0
        %2463 = vmatpush1.msra.mxu0 0.0
        %2464 = vmatprep.subr.mxu0 0.0
        %2465 = vmatpush1.msra.mxu0 0.0
        %2466 = vmatprep.subr.mxu0 0.0
        %2467 = vmatpush1.msra.mxu0 0.0
        %2468 = vmatprep.subr.mxu0 0.0
        %2469 = vmatpush1.msra.mxu0 0.0
        %2470 = vmatprep.subr.mxu0 0.0
        %2471 = vmatpush1.msra.mxu0 0.0
        %2472 = vmatprep.subr.mxu0 0.0
        %2473 = vmatpush1.msra.mxu0 0.0
        %2474 = vmatprep.subr.mxu0 0.0
        %2475 = vmatpush1.msra.mxu0 0.0
        %2476 = vmatprep.subr.mxu0 0.0
        %2477 = vmatpush1.msra.mxu0 0.0
        %2478 = vmatprep.subr.mxu0 0.0
        %2479 = vmatpush1.msra.mxu0 0.0
        %2480 = vmatprep.subr.mxu0 0.0
        %2481 = vmatpush1.msra.mxu0 0.0
        %2482 = vmatprep.subr.mxu0 0.0
        %2483 = vmatpush1.msra.mxu0 0.0
        %2484 = vmatprep.subr.mxu0 0.0
        %2485 = vmatpush1.msra.mxu0 0.0
        %2486 = vmatprep.mubr.f32.mxu0 0.0
        %2487 = vmatmul.mubr.f32.gmra.mrb[0].mxu0 %v2313
        %v2488 = vpop.f32.mrb[0].mxu0
        %v2489 = vpop.f32.mrb[0].mxu0
        %2490 = vmatprep.mubr.f32.mxu0 0.0
        %2491 = vmatmul.mubr.f32.gmra.mrb[0].mxu0 %v2312
        %v2492 = vpop.f32.mrb[0].mxu0
        %v2493 = vpop.f32.mrb[0].mxu0
        %2494 = vmatprep.mubr.f32.mxu0 0.0
        %2495 = vmatmul.mubr.f32.gmra.mrb[0].mxu0 %v2311
        %v2496 = vpop.f32.mrb[0].mxu0
        %v2497 = vadd.f32 %v2396, %v2496
        %v2498 = vpop.f32.mrb[0].mxu0
        %2499 = vmatprep.mubr.f32.mxu0 0.0
        %2500 = vmatmul.mubr.f32.gmra.mrb[0].mxu0 %v2310
        %v2501 = vpop.f32.mrb[0].mxu0
        %v2502 = vadd.f32 %v2401, %v2501
        %v2503 = vpop.f32.mrb[0].mxu0
        %2504 = vmatprep.mubr.f32.mxu0 0.0
        %2505 = vmatmul.mubr.f32.gmra.mrb[0].mxu0 %v2309
        %v2506 = vpop.f32.mrb[0].mxu0
        %v2507 = vadd.f32 %v2406, %v2506
        %v2508 = vpop.f32.mrb[0].mxu0
        %2509 = vmatprep.mubr.f32.mxu0 0.0
        %2510 = vmatmul.mubr.f32.gmra.mrb[0].mxu0 %v2308
        %v2511 = vpop.f32.mrb[0].mxu0
        %v2512 = vadd.f32 %v2411, %v2511
        %v2513 = vpop.f32.mrb[0].mxu0
        %2514 = vmatprep.mubr.f32.mxu0 0.0
        %2515 = vmatmul.mubr.f32.gmra.mrb[0].mxu0 %v2307
        %v2516 = vpop.f32.mrb[0].mxu0
        %v2517 = vpop.f32.mrb[0].mxu0
        %2518 = vmatprep.mubr.f32.mxu0 0.0
        %2519 = vmatmul.mubr.f32.gmra.mrb[0].mxu0 %v2314
        %v2520 = vpop.f32.mrb[0].mxu0
        %v2521 = vpop.f32.mrb[0].mxu0
        %2522 = vdwg.mxu0
        %v2523 = vadd.f32 %v2497, %v1867
        %v2524 = vadd.f32 %v2502, %v1868
        %v2525 = vadd.f32 %v2507, %v1869
        %v2526 = vadd.f32 %v2512, %v1870
        %2527 = vst [vmem:[%s452] sm:$0xff] %v2523
        %2528 = vst [vmem:[%s452 + $0x8] sm:$0xff] %v2524
        %2529 = vst [vmem:[%s452 + $0x10] sm:$0xff] %v2525
        %2530 = vst [vmem:[%s452 + $0x18] sm:$0xff] %v2526
        %s2531 = sand.u32 %s234, 1
        %s2532 = scalar_lea.sflag [#allocation4], %s2531
        %s2533 = sand.u32 %s234, 1
        %s2534 = smul.addr %s2533, 32
        %s2535 = scalar_lea.vmem [#allocation11], %s2534
        // Predicated region
        $region69: #{tpu_custom_call.1} parent=47 // pred_check
          %p2536 = pneg %p244
        $region70: #{tpu_custom_call.1} parent=47 // pred_check_branch
          %2538 = sbr.rel (%p2536) target = $region72
        $region71: #{tpu_custom_call.1} parent=47 // pred_region
          %s2539 = smul.u32 4, %s33
          %s2541 = ssub.s32 512, 512
          %2542 = vsyncadd %s2532, %s2541
          %s2543 = smul.addr %s32, 12
          %s2544 = sadd.s32 %s2539, %s2543
          %s2545 = smul.addr %s2544, 128
          %s2546 = scalar_lea.hbm %s7, %s2545
          %s2547 = sshll.u32 %s2535, 4
          %s2548 = int_to_ptr.vmem [resolvable:$true] %s2547
          %2553 = dma.vmem_to_hbm [thread:$0]  %s2548, 512, %s2546, %s2532, 128, 128, 8
        $region72: #{tpu_custom_call.1} parent=47 // pred_fallthru
          _
      $region48: #{tpu_custom_call.1} parent=5 // pred_fallthru
        _
      %p2554 = scmp.le.s32.totalorder 2, %s23
      // Predicated region
      $region73: #{tpu_custom_call.1} parent=5 // pred_check
        %p2555 = pneg %p2554
      $region74: #{tpu_custom_call.1} parent=5 // pred_check_branch
        %2557 = sbr.rel (%p2555) target = $region76
      $region75: #{tpu_custom_call.1} parent=5 // pred_region
        %s2558 = ssub.s32 %s23, 2
        // Predicated region
        $region77: #{tpu_custom_call.1} parent=75 // pred_check
          %p2559 = pneg %p250
        $region78: #{tpu_custom_call.1} parent=75 // pred_check_branch
          %2561 = sbr.rel (%p2559) target = $region80
        $region79: #{tpu_custom_call.1} parent=75 // pred_region
          %s2562 = sand.u32 %s235, 1
          %s2563 = scalar_lea.sflag [#allocation4], %s2562
          %s2564 = sand.u32 %s235, 1
          %s2565 = smul.addr %s2564, 32
          %s2566 = scalar_lea.vmem [#allocation11], %s2565
          %2567 = dma.done %s2563, 512
        $region80: #{tpu_custom_call.1} parent=75 // pred_fallthru
          _
      $region76: #{tpu_custom_call.1} parent=5 // pred_fallthru
        _
    $region6: #{tpu_custom_call.1} parent=1 // loop_footer
      %s27 = sadd.s32 1, %s23
    $region7: #{tpu_custom_call.1} parent=1 // loop_footer_branch
      %22 = sbr.rel target = $region3
    $region8: #{tpu_custom_call.1} parent=1 // loop_exit
      _
    %2568 = vsyncpa [#allocation3], 1
    %s2569 = scalar_lea.sflag [#allocation3], 1
    %2570 = vsyncpa %s2569, 1
    %2571 = vsyncpa [#allocation6], 1
    %s2572 = scalar_lea.sflag [#allocation6], 1
    %2573 = vsyncpa %s2572, 1
    %2574 = vsyncpa [#allocation9], 1
    %2575 = vsyncpa [#allocation4], 1
    %s2576 = scalar_lea.sflag [#allocation4], 1
    %2577 = vsyncpa %s2576, 1

</llo_original>
